<compile_context>
chip_gen: v7x
topology: tpu7x:2x2x1
jax: 0.10.0
libtpu: 0.0.40
codegen_flags: <defaults>
</compile_context>

<pallas_src>
import jax
import jax.numpy as jnp
from jax import lax
from jax.experimental import pallas as pl
from jax.experimental.pallas import tpu as pltpu


def patch_len(n, epochs):
    """Split n rows into `epochs` patches (same rule as the torch helper)."""
    base = n // epochs
    lens = [base] * epochs
    for i in range(n - base * epochs):
        lens[i] += 1
    if sum(lens) != n:
        raise ValueError("check your epochs and axis should be split again")
    return lens


def _sublane(itemsize):
    return {4: 8, 2: 16, 1: 32}.get(int(itemsize), 8)


def _round_up(v, m):
    return ((v + m - 1) // m) * m


def _vmem_config():
    """(block budget bytes, vmem_limit_bytes, min grid steps) per TPU generation."""
    cap = 64 << 20  # conservative default (v7x-class)
    try:
        info = pltpu.get_tpu_info()
        cap = int(getattr(info, "vmem_capacity_bytes", cap) or cap)
    except Exception:
        pass
    if cap >= (100 << 20):
        # v5e / v6e: 128 MiB physical VMEM, single TensorCore -> big blocks,
        # no even/min-step preference.
        return 40 << 20, 64 << 20, 1
    # v7x-class: 64 MiB physical VMEM, 2 TensorCores share the parallel axis ->
    # smaller double-buffered footprint and at least 4 grid steps when possible.
    return 20 << 20, 40 << 20, 4


def _pick_group(num_patches, n, d, in_dtype, out_dtype, budget_bytes, min_steps):
    """Patches per grid step: largest G fitting the (padded, double-buffered) VMEM
    budget; G is a multiple of the output sublane tile unless it covers everything."""
    in_sz = jnp.dtype(in_dtype).itemsize
    out_sz = jnp.dtype(out_dtype).itemsize
    sub = _sublane(out_sz)  # output block's second-minor dim must be a multiple of this

    # Per-patch VMEM bytes, rounded to hardware tiles: double-buffered in/out blocks
    # plus the single f32 scratch used for the row-wise lane-dense store.
    in_b = 2 * _round_up(n, _sublane(in_sz)) * _round_up(d, 128) * in_sz
    out_b = _round_up(n * n, 128) * out_sz
    acc_b = _round_up(n, 8) * _round_up(n, 128) * 4
    per_patch = 2 * in_b + 2 * out_b + acc_b

    g = max(1, int(budget_bytes) // per_patch)
    g = min(g, num_patches)
    if min_steps > 1:
        g = min(g, -(-num_patches // min_steps))  # keep >= min_steps grid steps
    if g >= num_patches:
        return num_patches
    g = max(sub, (g // sub) * sub)
    if g >= num_patches:
        return num_patches
    # Prefer a divisor of num_patches (no masked tail block) if it costs < 2x.
    for cand in range(g, max(sub, g // 2) - 1, -sub):
        if num_patches % cand == 0:
            return cand
    return g


def _e2r_kernel(x_ref, out_ref, acc_ref):
    # x_ref:   (2, G, n, D)  native-dtype VMEM tile (re on index 0, im on index 1)
    # out_ref: (G, n*n)      lane-dense output block
    # acc_ref: (G, n, n)     f32 VMEM scratch
    xr = x_ref[0]
    xi = x_ref[1]
    # Batched P @ P^T expressed as contracting dim 2 against dim 2 with batch dim 0
    # (no explicit .T; the MXU's transposed-operand path handles the self-contraction).
    dn = (((2,), (2,)), ((0,), (0,)))
    pr = lax.dot_general(xr, xr, dimension_numbers=dn, preferred_element_type=jnp.float32)
    pi = lax.dot_general(xi, xi, dimension_numbers=dn, preferred_element_type=jnp.float32)
    acc_ref[...] = (pr + pi) * 0.5

    # Re-emit the (G, n, n) result as (G, n*n): row j of every patch goes to lanes
    # [j*n, (j+1)*n).  Static-offset VMEM loads/stores only — HBM writeback of the
    # whole out block stays one dense DMA.
    n = acc_ref.shape[1]
    for j in range(n):
        out_ref[:, pl.ds(j * n, n)] = acc_ref[:, j, :].astype(out_ref.dtype)


def e2r_radar(x, epochs):
    """x: (2, B, N, D) or (2, N, D).  Returns (B, epochs, n, n), n = N // epochs."""
    x = jnp.asarray(x)
    if x.ndim == 3:
        # torch path: result ndim==3 -> unsqueeze(1); equivalent to a batch of 1.
        x = x[:, None]
    two, B, N, D = x.shape
    assert two == 2, "leading axis must hold (real, imag)"
    epochs = int(epochs)

    lens = patch_len(N, epochs)
    # torch.stack requires all Projmap outputs to share a shape -> equal patches.
    if len(set(lens)) != 1:
        raise ValueError("N must be divisible by epochs for P @ P^T stacking")
    n = lens[0]

    num_patches = B * epochs
    out_dtype = x.dtype

    # Small-problem path: even the flattened row (n*n lanes) is lane-sparse, so a
    # Pallas kernel would be dominated by masked partial stores and fixed per-call
    # overhead — let XLA fuse it.
    # TODO(synk): a VPU outer-product formulation with the patch index on the lane
    # axis could beat XLA here, but it changes the store layout substantially.
    if n * n < 128:
        xr = x[0].reshape(B, epochs, n, D)
        xi = x[1].reshape(B, epochs, n, D)
        pr = jnp.einsum("bend,bemd->benm", xr, xr)
        pi = jnp.einsum("bend,bemd->benm", xi, xi)
        return ((pr + pi) * 0.5).astype(out_dtype)

    # Free (bitcast) reshape — no concat, no extra HBM pass.
    xp = x.reshape(2, num_patches, n, D)

    budget, vmem_limit, min_steps = _vmem_config()
    G = _pick_group(num_patches, n, D, x.dtype, out_dtype, budget, min_steps)
    grid_len = pl.cdiv(num_patches, G)  # tail block (if any) is masked by Pallas

    in_sz = jnp.dtype(x.dtype).itemsize
    out_sz = jnp.dtype(out_dtype).itemsize
    cost = pl.CostEstimate(
        flops=4 * num_patches * n * n * D,  # 2 matmuls * 2*n*n*D per patch
        transcendentals=0,
        bytes_accessed=2 * num_patches * n * D * in_sz + num_patches * n * n * out_sz,
    )

    out = pl.pallas_call(
        _e2r_kernel,
        out_shape=jax.ShapeDtypeStruct((num_patches, n * n), out_dtype),
        grid=(grid_len,),
        in_specs=[pl.BlockSpec((2, G, n, D), lambda g: (0, g, 0, 0))],
        out_specs=pl.BlockSpec((G, n * n), lambda g: (g, 0)),
        scratch_shapes=[pltpu.VMEM((G, n, n), jnp.float32)],
        compiler_params=pltpu.CompilerParams(
            dimension_semantics=("parallel",),
            vmem_limit_bytes=vmem_limit,
        ),
        cost_estimate=cost,
    )(xp)

    # Lane-dense (num_patches, n*n) -> logical (B, epochs, n, n); XLA can fuse this
    # reshape into downstream consumers (it is outside the custom call on purpose).
    return out.reshape(B, epochs, n, n)


def _e2r_reference(x, epochs):
    """Pure-JAX reference mirroring the torch forward."""
    x = jnp.asarray(x)
    if x.ndim == 3:
        x = x[:, None]
    _, B, N, D = x.shape
    n = N // int(epochs)
    xr = x[0].reshape(B, int(epochs), n, D)
    xi = x[1].reshape(B, int(epochs), n, D)
    pr = jnp.einsum("bend,bemd->benm", xr, xr)
    pi = jnp.einsum("bend,bemd->benm", xi, xi)
    return (pr + pi) / 2.0


if __name__ == "__main__":
    key = jax.random.PRNGKey(0)
    k_re, k_im = jax.random.split(key)

    # Shapes chosen so the Pallas path is exercised: n = N // epochs = 16 -> n*n = 256.
    B, N, D = 2, 64, 16
    epochs = 4
    x_re = jax.random.normal(k_re, (B, N, D), dtype=jnp.float32)
    x_im = jax.random.normal(k_im, (B, N, D), dtype=jnp.float32)
    x = jnp.stack([x_re, x_im], axis=0)  # (2, B, N, D)

    fn = jax.jit(e2r_radar, static_argnums=1)

    out = jax.block_until_ready(fn(x, epochs))
    ref = _e2r_reference(x, epochs)
    assert out.shape == (B, epochs, N // epochs, N // epochs)
    assert jnp.allclose(out, ref, atol=1e-5, rtol=1e-5)

    # Tiny-n input (n = 4, n*n < 128) takes the fused-XLA fallback path; check it too.
    x_small = x[:, :, :16, :]
    out_s = jax.block_until_ready(fn(x_small, epochs))
    assert jnp.allclose(out_s, _e2r_reference(x_small, epochs), atol=1e-5, rtol=1e-5)

    print("KERNEL_OK")
</pallas_src>

<mosaic_0001>
module attributes {stable_mosaic.version = 11 : i64} {
  func.func @_e2r_kernel(%arg0: i32, %arg1: memref<2x8x16x16xf32, #tpu.memory_space<vmem>>, %arg2: memref<8x256xf32, #tpu.memory_space<vmem>>, %arg3: memref<8x16x16xf32, #tpu.memory_space<vmem>>) attributes {dimension_semantics = [#tpu.dimension_semantics<parallel>], iteration_bounds = array<i64: 1>, scalar_prefetch = 0 : i64, scratch_operands = 1 : i64, tpu.core_type = #tpu.core_type<tc>, window_params = [{transform_indices = @transform_0, window_bounds = array<i64: 2, 8, 16, 16>}, {transform_indices = @transform_1, window_bounds = array<i64: 8, 256>}]} {
    %c0 = arith.constant 0 : index
    %c0_0 = arith.constant 0 : index
    %c0_1 = arith.constant 0 : index
    %c0_2 = arith.constant 0 : index
    %0 = vector.load %arg1[%c0, %c0_0, %c0_1, %c0_2] : memref<2x8x16x16xf32, #tpu.memory_space<vmem>>, vector<1x8x16x16xf32>
    %1 = vector.shape_cast %0 : vector<1x8x16x16xf32> to vector<8x16x16xf32>
    %c1 = arith.constant 1 : index
    %c0_3 = arith.constant 0 : index
    %c0_4 = arith.constant 0 : index
    %c0_5 = arith.constant 0 : index
    %2 = vector.load %arg1[%c1, %c0_3, %c0_4, %c0_5] : memref<2x8x16x16xf32, #tpu.memory_space<vmem>>, vector<1x8x16x16xf32>
    %3 = vector.shape_cast %2 : vector<1x8x16x16xf32> to vector<8x16x16xf32>
    %cst = arith.constant dense<0.000000e+00> : vector<8x16x16xf32>
    %4 = tpu.matmul %1, %1, %cst {dimension_numbers = #tpu.dot_dimension_numbers<[2], [2], [1], [1], [0, 0, 0, 1, 1, 1], [0], [0]>} : vector<8x16x16xf32>, vector<8x16x16xf32>, vector<8x16x16xf32> -> vector<8x16x16xf32>
    %cst_6 = arith.constant dense<0.000000e+00> : vector<8x16x16xf32>
    %5 = tpu.matmul %3, %3, %cst_6 {dimension_numbers = #tpu.dot_dimension_numbers<[2], [2], [1], [1], [0, 0, 0, 1, 1, 1], [0], [0]>} : vector<8x16x16xf32>, vector<8x16x16xf32>, vector<8x16x16xf32> -> vector<8x16x16xf32>
    %6 = arith.addf %4, %5 : vector<8x16x16xf32>
    %cst_7 = arith.constant 5.000000e-01 : f32
    %7 = vector.broadcast %cst_7 : f32 to vector<8x16x16xf32>
    %8 = arith.mulf %6, %7 : vector<8x16x16xf32>
    %c0_8 = arith.constant 0 : index
    %c0_9 = arith.constant 0 : index
    %c0_10 = arith.constant 0 : index
    %9 = vector.load %arg3[%c0_8, %c0_9, %c0_10] : memref<8x16x16xf32, #tpu.memory_space<vmem>>, vector<8x16x16xf32>
    tpu.vector_store %arg3[%c0_8, %c0_9, %c0_10], %8 {strides = array<i32>} : memref<8x16x16xf32, #tpu.memory_space<vmem>>, vector<8x16x16xf32>,
    %c0_11 = arith.constant 0 : index
    %c0_12 = arith.constant 0 : index
    %c0_13 = arith.constant 0 : index
    %10 = vector.load %arg3[%c0_11, %c0_12, %c0_13] : memref<8x16x16xf32, #tpu.memory_space<vmem>>, vector<8x1x16xf32>
    %11 = vector.shape_cast %10 : vector<8x1x16xf32> to vector<8x16xf32>
    %c0_14 = arith.constant 0 : index
    %c0_15 = arith.constant 0 : index
    %12 = vector.load %arg2[%c0_14, %c0_15] : memref<8x256xf32, #tpu.memory_space<vmem>>, vector<8x16xf32>
    tpu.vector_store %arg2[%c0_14, %c0_15], %11 {strides = array<i32>} : memref<8x256xf32, #tpu.memory_space<vmem>>, vector<8x16xf32>,
    %c0_16 = arith.constant 0 : index
    %c1_17 = arith.constant 1 : index
    %c0_18 = arith.constant 0 : index
    %13 = vector.load %arg3[%c0_16, %c1_17, %c0_18] : memref<8x16x16xf32, #tpu.memory_space<vmem>>, vector<8x1x16xf32>
    %14 = vector.shape_cast %13 : vector<8x1x16xf32> to vector<8x16xf32>
    %c0_19 = arith.constant 0 : index
    %c16 = arith.constant 16 : index
    %15 = vector.load %arg2[%c0_19, %c16] : memref<8x256xf32, #tpu.memory_space<vmem>>, vector<8x16xf32>
    tpu.vector_store %arg2[%c0_19, %c16], %14 {strides = array<i32>} : memref<8x256xf32, #tpu.memory_space<vmem>>, vector<8x16xf32>,
    %c0_20 = arith.constant 0 : index
    %c2 = arith.constant 2 : index
    %c0_21 = arith.constant 0 : index
    %16 = vector.load %arg3[%c0_20, %c2, %c0_21] : memref<8x16x16xf32, #tpu.memory_space<vmem>>, vector<8x1x16xf32>
    %17 = vector.shape_cast %16 : vector<8x1x16xf32> to vector<8x16xf32>
    %c0_22 = arith.constant 0 : index
    %c32 = arith.constant 32 : index
    %18 = vector.load %arg2[%c0_22, %c32] : memref<8x256xf32, #tpu.memory_space<vmem>>, vector<8x16xf32>
    tpu.vector_store %arg2[%c0_22, %c32], %17 {strides = array<i32>} : memref<8x256xf32, #tpu.memory_space<vmem>>, vector<8x16xf32>,
    %c0_23 = arith.constant 0 : index
    %c3 = arith.constant 3 : index
    %c0_24 = arith.constant 0 : index
    %19 = vector.load %arg3[%c0_23, %c3, %c0_24] : memref<8x16x16xf32, #tpu.memory_space<vmem>>, vector<8x1x16xf32>
    %20 = vector.shape_cast %19 : vector<8x1x16xf32> to vector<8x16xf32>
    %c0_25 = arith.constant 0 : index
    %c48 = arith.constant 48 : index
    %21 = vector.load %arg2[%c0_25, %c48] : memref<8x256xf32, #tpu.memory_space<vmem>>, vector<8x16xf32>
    tpu.vector_store %arg2[%c0_25, %c48], %20 {strides = array<i32>} : memref<8x256xf32, #tpu.memory_space<vmem>>, vector<8x16xf32>,
    %c0_26 = arith.constant 0 : index
    %c4 = arith.constant 4 : index
    %c0_27 = arith.constant 0 : index
    %22 = vector.load %arg3[%c0_26, %c4, %c0_27] : memref<8x16x16xf32, #tpu.memory_space<vmem>>, vector<8x1x16xf32>
    %23 = vector.shape_cast %22 : vector<8x1x16xf32> to vector<8x16xf32>
    %c0_28 = arith.constant 0 : index
    %c64 = arith.constant 64 : index
    %24 = vector.load %arg2[%c0_28, %c64] : memref<8x256xf32, #tpu.memory_space<vmem>>, vector<8x16xf32>
    tpu.vector_store %arg2[%c0_28, %c64], %23 {strides = array<i32>} : memref<8x256xf32, #tpu.memory_space<vmem>>, vector<8x16xf32>,
    %c0_29 = arith.constant 0 : index
    %c5 = arith.constant 5 : index
    %c0_30 = arith.constant 0 : index
    %25 = vector.load %arg3[%c0_29, %c5, %c0_30] : memref<8x16x16xf32, #tpu.memory_space<vmem>>, vector<8x1x16xf32>
    %26 = vector.shape_cast %25 : vector<8x1x16xf32> to vector<8x16xf32>
    %c0_31 = arith.constant 0 : index
    %c80 = arith.constant 80 : index
    %27 = vector.load %arg2[%c0_31, %c80] : memref<8x256xf32, #tpu.memory_space<vmem>>, vector<8x16xf32>
    tpu.vector_store %arg2[%c0_31, %c80], %26 {strides = array<i32>} : memref<8x256xf32, #tpu.memory_space<vmem>>, vector<8x16xf32>,
    %c0_32 = arith.constant 0 : index
    %c6 = arith.constant 6 : index
    %c0_33 = arith.constant 0 : index
    %28 = vector.load %arg3[%c0_32, %c6, %c0_33] : memref<8x16x16xf32, #tpu.memory_space<vmem>>, vector<8x1x16xf32>
    %29 = vector.shape_cast %28 : vector<8x1x16xf32> to vector<8x16xf32>
    %c0_34 = arith.constant 0 : index
    %c96 = arith.constant 96 : index
    %30 = vector.load %arg2[%c0_34, %c96] : memref<8x256xf32, #tpu.memory_space<vmem>>, vector<8x16xf32>
    tpu.vector_store %arg2[%c0_34, %c96], %29 {strides = array<i32>} : memref<8x256xf32, #tpu.memory_space<vmem>>, vector<8x16xf32>,
    %c0_35 = arith.constant 0 : index
    %c7 = arith.constant 7 : index
    %c0_36 = arith.constant 0 : index
    %31 = vector.load %arg3[%c0_35, %c7, %c0_36] : memref<8x16x16xf32, #tpu.memory_space<vmem>>, vector<8x1x16xf32>
    %32 = vector.shape_cast %31 : vector<8x1x16xf32> to vector<8x16xf32>
    %c0_37 = arith.constant 0 : index
    %c112 = arith.constant 112 : index
    %33 = vector.load %arg2[%c0_37, %c112] : memref<8x256xf32, #tpu.memory_space<vmem>>, vector<8x16xf32>
    tpu.vector_store %arg2[%c0_37, %c112], %32 {strides = array<i32>} : memref<8x256xf32, #tpu.memory_space<vmem>>, vector<8x16xf32>,
    %c0_38 = arith.constant 0 : index
    %c8 = arith.constant 8 : index
    %c0_39 = arith.constant 0 : index
    %34 = vector.load %arg3[%c0_38, %c8, %c0_39] : memref<8x16x16xf32, #tpu.memory_space<vmem>>, vector<8x1x16xf32>
    %35 = vector.shape_cast %34 : vector<8x1x16xf32> to vector<8x16xf32>
    %c0_40 = arith.constant 0 : index
    %c128 = arith.constant 128 : index
    %36 = vector.load %arg2[%c0_40, %c128] : memref<8x256xf32, #tpu.memory_space<vmem>>, vector<8x16xf32>
    tpu.vector_store %arg2[%c0_40, %c128], %35 {strides = array<i32>} : memref<8x256xf32, #tpu.memory_space<vmem>>, vector<8x16xf32>,
    %c0_41 = arith.constant 0 : index
    %c9 = arith.constant 9 : index
    %c0_42 = arith.constant 0 : index
    %37 = vector.load %arg3[%c0_41, %c9, %c0_42] : memref<8x16x16xf32, #tpu.memory_space<vmem>>, vector<8x1x16xf32>
    %38 = vector.shape_cast %37 : vector<8x1x16xf32> to vector<8x16xf32>
    %c0_43 = arith.constant 0 : index
    %c144 = arith.constant 144 : index
    %39 = vector.load %arg2[%c0_43, %c144] : memref<8x256xf32, #tpu.memory_space<vmem>>, vector<8x16xf32>
    tpu.vector_store %arg2[%c0_43, %c144], %38 {strides = array<i32>} : memref<8x256xf32, #tpu.memory_space<vmem>>, vector<8x16xf32>,
    %c0_44 = arith.constant 0 : index
    %c10 = arith.constant 10 : index
    %c0_45 = arith.constant 0 : index
    %40 = vector.load %arg3[%c0_44, %c10, %c0_45] : memref<8x16x16xf32, #tpu.memory_space<vmem>>, vector<8x1x16xf32>
    %41 = vector.shape_cast %40 : vector<8x1x16xf32> to vector<8x16xf32>
    %c0_46 = arith.constant 0 : index
    %c160 = arith.constant 160 : index
    %42 = vector.load %arg2[%c0_46, %c160] : memref<8x256xf32, #tpu.memory_space<vmem>>, vector<8x16xf32>
    tpu.vector_store %arg2[%c0_46, %c160], %41 {strides = array<i32>} : memref<8x256xf32, #tpu.memory_space<vmem>>, vector<8x16xf32>,
    %c0_47 = arith.constant 0 : index
    %c11 = arith.constant 11 : index
    %c0_48 = arith.constant 0 : index
    %43 = vector.load %arg3[%c0_47, %c11, %c0_48] : memref<8x16x16xf32, #tpu.memory_space<vmem>>, vector<8x1x16xf32>
    %44 = vector.shape_cast %43 : vector<8x1x16xf32> to vector<8x16xf32>
    %c0_49 = arith.constant 0 : index
    %c176 = arith.constant 176 : index
    %45 = vector.load %arg2[%c0_49, %c176] : memref<8x256xf32, #tpu.memory_space<vmem>>, vector<8x16xf32>
    tpu.vector_store %arg2[%c0_49, %c176], %44 {strides = array<i32>} : memref<8x256xf32, #tpu.memory_space<vmem>>, vector<8x16xf32>,
    %c0_50 = arith.constant 0 : index
    %c12 = arith.constant 12 : index
    %c0_51 = arith.constant 0 : index
    %46 = vector.load %arg3[%c0_50, %c12, %c0_51] : memref<8x16x16xf32, #tpu.memory_space<vmem>>, vector<8x1x16xf32>
    %47 = vector.shape_cast %46 : vector<8x1x16xf32> to vector<8x16xf32>
    %c0_52 = arith.constant 0 : index
    %c192 = arith.constant 192 : index
    %48 = vector.load %arg2[%c0_52, %c192] : memref<8x256xf32, #tpu.memory_space<vmem>>, vector<8x16xf32>
    tpu.vector_store %arg2[%c0_52, %c192], %47 {strides = array<i32>} : memref<8x256xf32, #tpu.memory_space<vmem>>, vector<8x16xf32>,
    %c0_53 = arith.constant 0 : index
    %c13 = arith.constant 13 : index
    %c0_54 = arith.constant 0 : index
    %49 = vector.load %arg3[%c0_53, %c13, %c0_54] : memref<8x16x16xf32, #tpu.memory_space<vmem>>, vector<8x1x16xf32>
    %50 = vector.shape_cast %49 : vector<8x1x16xf32> to vector<8x16xf32>
    %c0_55 = arith.constant 0 : index
    %c208 = arith.constant 208 : index
    %51 = vector.load %arg2[%c0_55, %c208] : memref<8x256xf32, #tpu.memory_space<vmem>>, vector<8x16xf32>
    tpu.vector_store %arg2[%c0_55, %c208], %50 {strides = array<i32>} : memref<8x256xf32, #tpu.memory_space<vmem>>, vector<8x16xf32>,
    %c0_56 = arith.constant 0 : index
    %c14 = arith.constant 14 : index
    %c0_57 = arith.constant 0 : index
    %52 = vector.load %arg3[%c0_56, %c14, %c0_57] : memref<8x16x16xf32, #tpu.memory_space<vmem>>, vector<8x1x16xf32>
    %53 = vector.shape_cast %52 : vector<8x1x16xf32> to vector<8x16xf32>
    %c0_58 = arith.constant 0 : index
    %c224 = arith.constant 224 : index
    %54 = vector.load %arg2[%c0_58, %c224] : memref<8x256xf32, #tpu.memory_space<vmem>>, vector<8x16xf32>
    tpu.vector_store %arg2[%c0_58, %c224], %53 {strides = array<i32>} : memref<8x256xf32, #tpu.memory_space<vmem>>, vector<8x16xf32>,
    %c0_59 = arith.constant 0 : index
    %c15 = arith.constant 15 : index
    %c0_60 = arith.constant 0 : index
    %55 = vector.load %arg3[%c0_59, %c15, %c0_60] : memref<8x16x16xf32, #tpu.memory_space<vmem>>, vector<8x1x16xf32>
    %56 = vector.shape_cast %55 : vector<8x1x16xf32> to vector<8x16xf32>
    %c0_61 = arith.constant 0 : index
    %c240 = arith.constant 240 : index
    %57 = vector.load %arg2[%c0_61, %c240] : memref<8x256xf32, #tpu.memory_space<vmem>>, vector<8x16xf32>
    tpu.vector_store %arg2[%c0_61, %c240], %56 {strides = array<i32>} : memref<8x256xf32, #tpu.memory_space<vmem>>, vector<8x16xf32>,
    return
  }
  func.func @transform_0(%arg0: i32) -> (i32, i32, i32, i32) {
    %c0_i32 = arith.constant 0 : i32
    %c0_i32_0 = arith.constant 0 : i32
    %c0_i32_1 = arith.constant 0 : i32
    %c0_i32_2 = arith.constant 0 : i32
    return %c0_i32, %arg0, %c0_i32_0, %c0_i32_1 : i32, i32, i32, i32
  }
  func.func @transform_1(%arg0: i32) -> (i32, i32) {
    %c0_i32 = arith.constant 0 : i32
    %c0_i32_0 = arith.constant 0 : i32
    return %arg0, %c0_i32 : i32, i32
  }
}

</mosaic_0001>

<llo_original>
// kernel: e2r_radar.1
$region0: #{e2r_radar.1}
  #allocation0 [shape = 'u32[]', space=smem, size = 0x4, offset = 0x4, fixed_abs, tag = 'smem constant byte address 0x4 - core index']
  #allocation1 [shape = 'u32[144,128]{1,0:T(1,128)}', space=vmem, size = 0x12000, scoped, tag = 'internal scratch']
  #allocation2 [shape = 'f32[8,16,16]{2,1,0:T(8,128)}', space=vmem, size = 0x10000, scoped, tag = 'scratch operand']
  %s0 = inlined_call_operand.vmem [shape: f32[2,8,16,16], index: 0, kind: input, shape index: {}]
  %s1 = inlined_call_operand.vmem [shape: f32[8,256], index: 1, kind: output, shape index: {}]
  %s2 = sld [smem:[#allocation0]]
  $region14: #{e2r_radar.1} parent=0
    _
  %s4 = ssub.s32 1, %s2
  %s5 = scalar_select 0, %s4, %s2
  // Predicated region
  $region2: #{e2r_radar.1} parent=0 // pred_check
    _
  $region3: #{e2r_radar.1} parent=0 // pred_check_branch
    %7 = sbr.rel (0) target = $region5
  $region4: #{e2r_radar.1} parent=0 // pred_region
    _
  $region5: #{e2r_radar.1} parent=0 // pred_fallthru
    _
  %v8 = vld [vmem:[%s0] sm:$0xff]
  %v9 = vld [vmem:[%s0 + $0x8] sm:$0xff]
  %v10 = vld [vmem:[%s0 + $0x10] sm:$0xff]
  %v11 = vld [vmem:[%s0 + $0x18] sm:$0xff]
  %v12 = vld [vmem:[%s0 + $0x20] sm:$0xff]
  %v13 = vld [vmem:[%s0 + $0x28] sm:$0xff]
  %v14 = vld [vmem:[%s0 + $0x30] sm:$0xff]
  %v15 = vld [vmem:[%s0 + $0x38] sm:$0xff]
  %v16 = vld [vmem:[%s0 + $0x40] sm:$0xff]
  %v17 = vld [vmem:[%s0 + $0x48] sm:$0xff]
  %v18 = vld [vmem:[%s0 + $0x50] sm:$0xff]
  %v19 = vld [vmem:[%s0 + $0x58] sm:$0xff]
  %v20 = vld [vmem:[%s0 + $0x60] sm:$0xff]
  %v21 = vld [vmem:[%s0 + $0x68] sm:$0xff]
  %v22 = vld [vmem:[%s0 + $0x70] sm:$0xff]
  %v23 = vld [vmem:[%s0 + $0x78] sm:$0xff]
  %s24 = scalar_lea.vmem %s0, 128
  %v25 = vld [vmem:[%s24] sm:$0xff]
  %v26 = vld [vmem:[%s24 + $0x8] sm:$0xff]
  %v27 = vld [vmem:[%s24 + $0x10] sm:$0xff]
  %v28 = vld [vmem:[%s24 + $0x18] sm:$0xff]
  %v29 = vld [vmem:[%s24 + $0x20] sm:$0xff]
  %v30 = vld [vmem:[%s24 + $0x28] sm:$0xff]
  %v31 = vld [vmem:[%s24 + $0x30] sm:$0xff]
  %v32 = vld [vmem:[%s24 + $0x38] sm:$0xff]
  %v33 = vld [vmem:[%s24 + $0x40] sm:$0xff]
  %v34 = vld [vmem:[%s24 + $0x48] sm:$0xff]
  %v35 = vld [vmem:[%s24 + $0x50] sm:$0xff]
  %v36 = vld [vmem:[%s24 + $0x58] sm:$0xff]
  %v37 = vld [vmem:[%s24 + $0x60] sm:$0xff]
  %v38 = vld [vmem:[%s24 + $0x68] sm:$0xff]
  %v39 = vld [vmem:[%s24 + $0x70] sm:$0xff]
  %v40 = vld [vmem:[%s24 + $0x78] sm:$0xff]
  %vm41 = vcmask 130048
  %v43 = vsel %vm41, %v25, 0
  %v46 = vsel %vm41, %v26, 0
  %48 = vmatprep.subr.mxu0 0.0
  %49 = vmatpush1.xpose.msra.mxu0 %v43
  %50 = vmatprep.subr.mxu0 0.0
  %51 = vmatpush1.xpose.msra.mxu0 %v46
  %52 = vmatprep.subr.mxu0 0.0
  %53 = vmatpush1.xpose.msra.mxu0 0.0
  %54 = vmatprep.subr.mxu0 0.0
  %55 = vmatpush1.xpose.msra.mxu0 0.0
  %56 = vmatprep.subr.mxu0 0.0
  %57 = vmatpush1.xpose.msra.mxu0 0.0
  %58 = vmatprep.subr.mxu0 0.0
  %59 = vmatpush1.xpose.msra.mxu0 0.0
  %60 = vmatprep.subr.mxu0 0.0
  %61 = vmatpush1.xpose.msra.mxu0 0.0
  %62 = vmatprep.subr.mxu0 0.0
  %63 = vmatpush1.xpose.msra.mxu0 0.0
  %64 = vmatprep.subr.mxu0 0.0
  %65 = vmatpush1.xpose.msra.mxu0 0.0
  %66 = vmatprep.subr.mxu0 0.0
  %67 = vmatpush1.xpose.msra.mxu0 0.0
  %68 = vmatprep.subr.mxu0 0.0
  %69 = vmatpush1.xpose.msra.mxu0 0.0
  %70 = vmatprep.subr.mxu0 0.0
  %71 = vmatpush1.xpose.msra.mxu0 0.0
  %72 = vmatprep.subr.mxu0 0.0
  %73 = vmatpush1.xpose.msra.mxu0 0.0
  %74 = vmatprep.subr.mxu0 0.0
  %75 = vmatpush1.xpose.msra.mxu0 0.0
  %76 = vmatprep.subr.mxu0 0.0
  %77 = vmatpush1.xpose.msra.mxu0 0.0
  %78 = vmatprep.subr.mxu0 0.0
  %79 = vmatpush1.xpose.msra.mxu0 0.0
  %80 = vmatprep.subr.mxu0 0.0
  %81 = vmatpush1.xpose.msra.mxu0 0.0
  %82 = vmatprep.subr.mxu0 0.0
  %83 = vmatpush1.xpose.msra.mxu0 0.0
  %84 = vmatprep.subr.mxu0 0.0
  %85 = vmatpush1.xpose.msra.mxu0 0.0
  %86 = vmatprep.subr.mxu0 0.0
  %87 = vmatpush1.xpose.msra.mxu0 0.0
  %88 = vmatprep.subr.mxu0 0.0
  %89 = vmatpush1.xpose.msra.mxu0 0.0
  %90 = vmatprep.subr.mxu0 0.0
  %91 = vmatpush1.xpose.msra.mxu0 0.0
  %92 = vmatprep.subr.mxu0 0.0
  %93 = vmatpush1.xpose.msra.mxu0 0.0
  %94 = vmatprep.subr.mxu0 0.0
  %95 = vmatpush1.xpose.msra.mxu0 0.0
  %96 = vmatprep.subr.mxu0 0.0
  %97 = vmatpush1.xpose.msra.mxu0 0.0
  %98 = vmatprep.subr.mxu0 0.0
  %99 = vmatpush1.xpose.msra.mxu0 0.0
  %100 = vmatprep.subr.mxu0 0.0
  %101 = vmatpush1.xpose.msra.mxu0 0.0
  %102 = vmatprep.subr.mxu0 0.0
  %103 = vmatpush1.xpose.msra.mxu0 0.0
  %104 = vmatprep.subr.mxu0 0.0
  %105 = vmatpush1.xpose.msra.mxu0 0.0
  %106 = vmatprep.subr.mxu0 0.0
  %107 = vmatpush1.xpose.msra.mxu0 0.0
  %108 = vmatprep.subr.mxu0 0.0
  %109 = vmatpush1.xpose.msra.mxu0 0.0
  %110 = vmatprep.subr.mxu0 0.0
  %111 = vmatpush1.xpose.msra.mxu0 0.0
  %112 = vmatprep.mubr.f32.mxu0 0.0
  %113 = vmatmul.mubr.f32.gmra.mrb[0].mxu0 %v43
  %v114 = vpop.f32.mrb[0].mxu0
  %v115 = vadd.f32 0.0, %v114
  %v116 = vpop.f32.mrb[0].mxu0
  %117 = vmatprep.mubr.f32.mxu0 0.0
  %118 = vmatmul.mubr.f32.gmra.mrb[0].mxu0 %v46
  %v119 = vpop.f32.mrb[0].mxu0
  %v120 = vadd.f32 0.0, %v119
  %v121 = vpop.f32.mrb[0].mxu0
  %122 = vdwg.mxu0
  %v124 = vsel %vm41, %v27, 0
  %v127 = vsel %vm41, %v28, 0
  %129 = vmatprep.subr.mxu0 0.0
  %130 = vmatpush1.xpose.msra.mxu0 %v124
  %131 = vmatprep.subr.mxu0 0.0
  %132 = vmatpush1.xpose.msra.mxu0 %v127
  %133 = vmatprep.subr.mxu0 0.0
  %134 = vmatpush1.xpose.msra.mxu0 0.0
  %135 = vmatprep.subr.mxu0 0.0
  %136 = vmatpush1.xpose.msra.mxu0 0.0
  %137 = vmatprep.subr.mxu0 0.0
  %138 = vmatpush1.xpose.msra.mxu0 0.0
  %139 = vmatprep.subr.mxu0 0.0
  %140 = vmatpush1.xpose.msra.mxu0 0.0
  %141 = vmatprep.subr.mxu0 0.0
  %142 = vmatpush1.xpose.msra.mxu0 0.0
  %143 = vmatprep.subr.mxu0 0.0
  %144 = vmatpush1.xpose.msra.mxu0 0.0
  %145 = vmatprep.subr.mxu0 0.0
  %146 = vmatpush1.xpose.msra.mxu0 0.0
  %147 = vmatprep.subr.mxu0 0.0
  %148 = vmatpush1.xpose.msra.mxu0 0.0
  %149 = vmatprep.subr.mxu0 0.0
  %150 = vmatpush1.xpose.msra.mxu0 0.0
  %151 = vmatprep.subr.mxu0 0.0
  %152 = vmatpush1.xpose.msra.mxu0 0.0
  %153 = vmatprep.subr.mxu0 0.0
  %154 = vmatpush1.xpose.msra.mxu0 0.0
  %155 = vmatprep.subr.mxu0 0.0
  %156 = vmatpush1.xpose.msra.mxu0 0.0
  %157 = vmatprep.subr.mxu0 0.0
  %158 = vmatpush1.xpose.msra.mxu0 0.0
  %159 = vmatprep.subr.mxu0 0.0
  %160 = vmatpush1.xpose.msra.mxu0 0.0
  %161 = vmatprep.subr.mxu0 0.0
  %162 = vmatpush1.xpose.msra.mxu0 0.0
  %163 = vmatprep.subr.mxu0 0.0
  %164 = vmatpush1.xpose.msra.mxu0 0.0
  %165 = vmatprep.subr.mxu0 0.0
  %166 = vmatpush1.xpose.msra.mxu0 0.0
  %167 = vmatprep.subr.mxu0 0.0
  %168 = vmatpush1.xpose.msra.mxu0 0.0
  %169 = vmatprep.subr.mxu0 0.0
  %170 = vmatpush1.xpose.msra.mxu0 0.0
  %171 = vmatprep.subr.mxu0 0.0
  %172 = vmatpush1.xpose.msra.mxu0 0.0
  %173 = vmatprep.subr.mxu0 0.0
  %174 = vmatpush1.xpose.msra.mxu0 0.0
  %175 = vmatprep.subr.mxu0 0.0
  %176 = vmatpush1.xpose.msra.mxu0 0.0
  %177 = vmatprep.subr.mxu0 0.0
  %178 = vmatpush1.xpose.msra.mxu0 0.0
  %179 = vmatprep.subr.mxu0 0.0
  %180 = vmatpush1.xpose.msra.mxu0 0.0
  %181 = vmatprep.subr.mxu0 0.0
  %182 = vmatpush1.xpose.msra.mxu0 0.0
  %183 = vmatprep.subr.mxu0 0.0
  %184 = vmatpush1.xpose.msra.mxu0 0.0
  %185 = vmatprep.subr.mxu0 0.0
  %186 = vmatpush1.xpose.msra.mxu0 0.0
  %187 = vmatprep.subr.mxu0 0.0
  %188 = vmatpush1.xpose.msra.mxu0 0.0
  %189 = vmatprep.subr.mxu0 0.0
  %190 = vmatpush1.xpose.msra.mxu0 0.0
  %191 = vmatprep.subr.mxu0 0.0
  %192 = vmatpush1.xpose.msra.mxu0 0.0
  %193 = vmatprep.mubr.f32.mxu0 0.0
  %194 = vmatmul.mubr.f32.gmra.mrb[0].mxu0 %v124
  %v195 = vpop.f32.mrb[0].mxu0
  %v196 = vadd.f32 0.0, %v195
  %v197 = vpop.f32.mrb[0].mxu0
  %198 = vmatprep.mubr.f32.mxu0 0.0
  %199 = vmatmul.mubr.f32.gmra.mrb[0].mxu0 %v127
  %v200 = vpop.f32.mrb[0].mxu0
  %v201 = vadd.f32 0.0, %v200
  %v202 = vpop.f32.mrb[0].mxu0
  %203 = vdwg.mxu0
  %v205 = vsel %vm41, %v29, 0
  %v208 = vsel %vm41, %v30, 0
  %210 = vmatprep.subr.mxu0 0.0
  %211 = vmatpush1.xpose.msra.mxu0 %v205
  %212 = vmatprep.subr.mxu0 0.0
  %213 = vmatpush1.xpose.msra.mxu0 %v208
  %214 = vmatprep.subr.mxu0 0.0
  %215 = vmatpush1.xpose.msra.mxu0 0.0
  %216 = vmatprep.subr.mxu0 0.0
  %217 = vmatpush1.xpose.msra.mxu0 0.0
  %218 = vmatprep.subr.mxu0 0.0
  %219 = vmatpush1.xpose.msra.mxu0 0.0
  %220 = vmatprep.subr.mxu0 0.0
  %221 = vmatpush1.xpose.msra.mxu0 0.0
  %222 = vmatprep.subr.mxu0 0.0
  %223 = vmatpush1.xpose.msra.mxu0 0.0
  %224 = vmatprep.subr.mxu0 0.0
  %225 = vmatpush1.xpose.msra.mxu0 0.0
  %226 = vmatprep.subr.mxu0 0.0
  %227 = vmatpush1.xpose.msra.mxu0 0.0
  %228 = vmatprep.subr.mxu0 0.0
  %229 = vmatpush1.xpose.msra.mxu0 0.0
  %230 = vmatprep.subr.mxu0 0.0
  %231 = vmatpush1.xpose.msra.mxu0 0.0
  %232 = vmatprep.subr.mxu0 0.0
  %233 = vmatpush1.xpose.msra.mxu0 0.0
  %234 = vmatprep.subr.mxu0 0.0
  %235 = vmatpush1.xpose.msra.mxu0 0.0
  %236 = vmatprep.subr.mxu0 0.0
  %237 = vmatpush1.xpose.msra.mxu0 0.0
  %238 = vmatprep.subr.mxu0 0.0
  %239 = vmatpush1.xpose.msra.mxu0 0.0
  %240 = vmatprep.subr.mxu0 0.0
  %241 = vmatpush1.xpose.msra.mxu0 0.0
  %242 = vmatprep.subr.mxu0 0.0
  %243 = vmatpush1.xpose.msra.mxu0 0.0
  %244 = vmatprep.subr.mxu0 0.0
  %245 = vmatpush1.xpose.msra.mxu0 0.0
  %246 = vmatprep.subr.mxu0 0.0
  %247 = vmatpush1.xpose.msra.mxu0 0.0
  %248 = vmatprep.subr.mxu0 0.0
  %249 = vmatpush1.xpose.msra.mxu0 0.0
  %250 = vmatprep.subr.mxu0 0.0
  %251 = vmatpush1.xpose.msra.mxu0 0.0
  %252 = vmatprep.subr.mxu0 0.0
  %253 = vmatpush1.xpose.msra.mxu0 0.0
  %254 = vmatprep.subr.mxu0 0.0
  %255 = vmatpush1.xpose.msra.mxu0 0.0
  %256 = vmatprep.subr.mxu0 0.0
  %257 = vmatpush1.xpose.msra.mxu0 0.0
  %258 = vmatprep.subr.mxu0 0.0
  %259 = vmatpush1.xpose.msra.mxu0 0.0
  %260 = vmatprep.subr.mxu0 0.0
  %261 = vmatpush1.xpose.msra.mxu0 0.0
  %262 = vmatprep.subr.mxu0 0.0
  %263 = vmatpush1.xpose.msra.mxu0 0.0
  %264 = vmatprep.subr.mxu0 0.0
  %265 = vmatpush1.xpose.msra.mxu0 0.0
  %266 = vmatprep.subr.mxu0 0.0
  %267 = vmatpush1.xpose.msra.mxu0 0.0
  %268 = vmatprep.subr.mxu0 0.0
  %269 = vmatpush1.xpose.msra.mxu0 0.0
  %270 = vmatprep.subr.mxu0 0.0
  %271 = vmatpush1.xpose.msra.mxu0 0.0
  %272 = vmatprep.subr.mxu0 0.0
  %273 = vmatpush1.xpose.msra.mxu0 0.0
  %274 = vmatprep.mubr.f32.mxu0 0.0
  %275 = vmatmul.mubr.f32.gmra.mrb[0].mxu0 %v205
  %v276 = vpop.f32.mrb[0].mxu0
  %v277 = vadd.f32 0.0, %v276
  %v278 = vpop.f32.mrb[0].mxu0
  %279 = vmatprep.mubr.f32.mxu0 0.0
  %280 = vmatmul.mubr.f32.gmra.mrb[0].mxu0 %v208
  %v281 = vpop.f32.mrb[0].mxu0
  %v282 = vadd.f32 0.0, %v281
  %v283 = vpop.f32.mrb[0].mxu0
  %284 = vdwg.mxu0
  %v286 = vsel %vm41, %v31, 0
  %v289 = vsel %vm41, %v32, 0
  %291 = vmatprep.subr.mxu0 0.0
  %292 = vmatpush1.xpose.msra.mxu0 %v286
  %293 = vmatprep.subr.mxu0 0.0
  %294 = vmatpush1.xpose.msra.mxu0 %v289
  %295 = vmatprep.subr.mxu0 0.0
  %296 = vmatpush1.xpose.msra.mxu0 0.0
  %297 = vmatprep.subr.mxu0 0.0
  %298 = vmatpush1.xpose.msra.mxu0 0.0
  %299 = vmatprep.subr.mxu0 0.0
  %300 = vmatpush1.xpose.msra.mxu0 0.0
  %301 = vmatprep.subr.mxu0 0.0
  %302 = vmatpush1.xpose.msra.mxu0 0.0
  %303 = vmatprep.subr.mxu0 0.0
  %304 = vmatpush1.xpose.msra.mxu0 0.0
  %305 = vmatprep.subr.mxu0 0.0
  %306 = vmatpush1.xpose.msra.mxu0 0.0
  %307 = vmatprep.subr.mxu0 0.0
  %308 = vmatpush1.xpose.msra.mxu0 0.0
  %309 = vmatprep.subr.mxu0 0.0
  %310 = vmatpush1.xpose.msra.mxu0 0.0
  %311 = vmatprep.subr.mxu0 0.0
  %312 = vmatpush1.xpose.msra.mxu0 0.0
  %313 = vmatprep.subr.mxu0 0.0
  %314 = vmatpush1.xpose.msra.mxu0 0.0
  %315 = vmatprep.subr.mxu0 0.0
  %316 = vmatpush1.xpose.msra.mxu0 0.0
  %317 = vmatprep.subr.mxu0 0.0
  %318 = vmatpush1.xpose.msra.mxu0 0.0
  %319 = vmatprep.subr.mxu0 0.0
  %320 = vmatpush1.xpose.msra.mxu0 0.0
  %321 = vmatprep.subr.mxu0 0.0
  %322 = vmatpush1.xpose.msra.mxu0 0.0
  %323 = vmatprep.subr.mxu0 0.0
  %324 = vmatpush1.xpose.msra.mxu0 0.0
  %325 = vmatprep.subr.mxu0 0.0
  %326 = vmatpush1.xpose.msra.mxu0 0.0
  %327 = vmatprep.subr.mxu0 0.0
  %328 = vmatpush1.xpose.msra.mxu0 0.0
  %329 = vmatprep.subr.mxu0 0.0
  %330 = vmatpush1.xpose.msra.mxu0 0.0
  %331 = vmatprep.subr.mxu0 0.0
  %332 = vmatpush1.xpose.msra.mxu0 0.0
  %333 = vmatprep.subr.mxu0 0.0
  %334 = vmatpush1.xpose.msra.mxu0 0.0
  %335 = vmatprep.subr.mxu0 0.0
  %336 = vmatpush1.xpose.msra.mxu0 0.0
  %337 = vmatprep.subr.mxu0 0.0
  %338 = vmatpush1.xpose.msra.mxu0 0.0
  %339 = vmatprep.subr.mxu0 0.0
  %340 = vmatpush1.xpose.msra.mxu0 0.0
  %341 = vmatprep.subr.mxu0 0.0
  %342 = vmatpush1.xpose.msra.mxu0 0.0
  %343 = vmatprep.subr.mxu0 0.0
  %344 = vmatpush1.xpose.msra.mxu0 0.0
  %345 = vmatprep.subr.mxu0 0.0
  %346 = vmatpush1.xpose.msra.mxu0 0.0
  %347 = vmatprep.subr.mxu0 0.0
  %348 = vmatpush1.xpose.msra.mxu0 0.0
  %349 = vmatprep.subr.mxu0 0.0
  %350 = vmatpush1.xpose.msra.mxu0 0.0
  %351 = vmatprep.subr.mxu0 0.0
  %352 = vmatpush1.xpose.msra.mxu0 0.0
  %353 = vmatprep.subr.mxu0 0.0
  %354 = vmatpush1.xpose.msra.mxu0 0.0
  %355 = vmatprep.mubr.f32.mxu0 0.0
  %356 = vmatmul.mubr.f32.gmra.mrb[0].mxu0 %v286
  %v357 = vpop.f32.mrb[0].mxu0
  %v358 = vadd.f32 0.0, %v357
  %v359 = vpop.f32.mrb[0].mxu0
  %360 = vmatprep.mubr.f32.mxu0 0.0
  %361 = vmatmul.mubr.f32.gmra.mrb[0].mxu0 %v289
  %v362 = vpop.f32.mrb[0].mxu0
  %v363 = vadd.f32 0.0, %v362
  %v364 = vpop.f32.mrb[0].mxu0
  %365 = vdwg.mxu0
  %v367 = vsel %vm41, %v33, 0
  %v370 = vsel %vm41, %v34, 0
  %372 = vmatprep.subr.mxu0 0.0
  %373 = vmatpush1.xpose.msra.mxu0 %v367
  %374 = vmatprep.subr.mxu0 0.0
  %375 = vmatpush1.xpose.msra.mxu0 %v370
  %376 = vmatprep.subr.mxu0 0.0
  %377 = vmatpush1.xpose.msra.mxu0 0.0
  %378 = vmatprep.subr.mxu0 0.0
  %379 = vmatpush1.xpose.msra.mxu0 0.0
  %380 = vmatprep.subr.mxu0 0.0
  %381 = vmatpush1.xpose.msra.mxu0 0.0
  %382 = vmatprep.subr.mxu0 0.0
  %383 = vmatpush1.xpose.msra.mxu0 0.0
  %384 = vmatprep.subr.mxu0 0.0
  %385 = vmatpush1.xpose.msra.mxu0 0.0
  %386 = vmatprep.subr.mxu0 0.0
  %387 = vmatpush1.xpose.msra.mxu0 0.0
  %388 = vmatprep.subr.mxu0 0.0
  %389 = vmatpush1.xpose.msra.mxu0 0.0
  %390 = vmatprep.subr.mxu0 0.0
  %391 = vmatpush1.xpose.msra.mxu0 0.0
  %392 = vmatprep.subr.mxu0 0.0
  %393 = vmatpush1.xpose.msra.mxu0 0.0
  %394 = vmatprep.subr.mxu0 0.0
  %395 = vmatpush1.xpose.msra.mxu0 0.0
  %396 = vmatprep.subr.mxu0 0.0
  %397 = vmatpush1.xpose.msra.mxu0 0.0
  %398 = vmatprep.subr.mxu0 0.0
  %399 = vmatpush1.xpose.msra.mxu0 0.0
  %400 = vmatprep.subr.mxu0 0.0
  %401 = vmatpush1.xpose.msra.mxu0 0.0
  %402 = vmatprep.subr.mxu0 0.0
  %403 = vmatpush1.xpose.msra.mxu0 0.0
  %404 = vmatprep.subr.mxu0 0.0
  %405 = vmatpush1.xpose.msra.mxu0 0.0
  %406 = vmatprep.subr.mxu0 0.0
  %407 = vmatpush1.xpose.msra.mxu0 0.0
  %408 = vmatprep.subr.mxu0 0.0
  %409 = vmatpush1.xpose.msra.mxu0 0.0
  %410 = vmatprep.subr.mxu0 0.0
  %411 = vmatpush1.xpose.msra.mxu0 0.0
  %412 = vmatprep.subr.mxu0 0.0
  %413 = vmatpush1.xpose.msra.mxu0 0.0
  %414 = vmatprep.subr.mxu0 0.0
  %415 = vmatpush1.xpose.msra.mxu0 0.0
  %416 = vmatprep.subr.mxu0 0.0
  %417 = vmatpush1.xpose.msra.mxu0 0.0
  %418 = vmatprep.subr.mxu0 0.0
  %419 = vmatpush1.xpose.msra.mxu0 0.0
  %420 = vmatprep.subr.mxu0 0.0
  %421 = vmatpush1.xpose.msra.mxu0 0.0
  %422 = vmatprep.subr.mxu0 0.0
  %423 = vmatpush1.xpose.msra.mxu0 0.0
  %424 = vmatprep.subr.mxu0 0.0
  %425 = vmatpush1.xpose.msra.mxu0 0.0
  %426 = vmatprep.subr.mxu0 0.0
  %427 = vmatpush1.xpose.msra.mxu0 0.0
  %428 = vmatprep.subr.mxu0 0.0
  %429 = vmatpush1.xpose.msra.mxu0 0.0
  %430 = vmatprep.subr.mxu0 0.0
  %431 = vmatpush1.xpose.msra.mxu0 0.0
  %432 = vmatprep.subr.mxu0 0.0
  %433 = vmatpush1.xpose.msra.mxu0 0.0
  %434 = vmatprep.subr.mxu0 0.0
  %435 = vmatpush1.xpose.msra.mxu0 0.0
  %436 = vmatprep.mubr.f32.mxu0 0.0
  %437 = vmatmul.mubr.f32.gmra.mrb[0].mxu0 %v367
  %v438 = vpop.f32.mrb[0].mxu0
  %v439 = vadd.f32 0.0, %v438
  %v440 = vpop.f32.mrb[0].mxu0
  %441 = vmatprep.mubr.f32.mxu0 0.0
  %442 = vmatmul.mubr.f32.gmra.mrb[0].mxu0 %v370
  %v443 = vpop.f32.mrb[0].mxu0
  %v444 = vadd.f32 0.0, %v443
  %v445 = vpop.f32.mrb[0].mxu0
  %446 = vdwg.mxu0
  %v448 = vsel %vm41, %v35, 0
  %v451 = vsel %vm41, %v36, 0
  %453 = vmatprep.subr.mxu0 0.0
  %454 = vmatpush1.xpose.msra.mxu0 %v448
  %455 = vmatprep.subr.mxu0 0.0
  %456 = vmatpush1.xpose.msra.mxu0 %v451
  %457 = vmatprep.subr.mxu0 0.0
  %458 = vmatpush1.xpose.msra.mxu0 0.0
  %459 = vmatprep.subr.mxu0 0.0
  %460 = vmatpush1.xpose.msra.mxu0 0.0
  %461 = vmatprep.subr.mxu0 0.0
  %462 = vmatpush1.xpose.msra.mxu0 0.0
  %463 = vmatprep.subr.mxu0 0.0
  %464 = vmatpush1.xpose.msra.mxu0 0.0
  %465 = vmatprep.subr.mxu0 0.0
  %466 = vmatpush1.xpose.msra.mxu0 0.0
  %467 = vmatprep.subr.mxu0 0.0
  %468 = vmatpush1.xpose.msra.mxu0 0.0
  %469 = vmatprep.subr.mxu0 0.0
  %470 = vmatpush1.xpose.msra.mxu0 0.0
  %471 = vmatprep.subr.mxu0 0.0
  %472 = vmatpush1.xpose.msra.mxu0 0.0
  %473 = vmatprep.subr.mxu0 0.0
  %474 = vmatpush1.xpose.msra.mxu0 0.0
  %475 = vmatprep.subr.mxu0 0.0
  %476 = vmatpush1.xpose.msra.mxu0 0.0
  %477 = vmatprep.subr.mxu0 0.0
  %478 = vmatpush1.xpose.msra.mxu0 0.0
  %479 = vmatprep.subr.mxu0 0.0
  %480 = vmatpush1.xpose.msra.mxu0 0.0
  %481 = vmatprep.subr.mxu0 0.0
  %482 = vmatpush1.xpose.msra.mxu0 0.0
  %483 = vmatprep.subr.mxu0 0.0
  %484 = vmatpush1.xpose.msra.mxu0 0.0
  %485 = vmatprep.subr.mxu0 0.0
  %486 = vmatpush1.xpose.msra.mxu0 0.0
  %487 = vmatprep.subr.mxu0 0.0
  %488 = vmatpush1.xpose.msra.mxu0 0.0
  %489 = vmatprep.subr.mxu0 0.0
  %490 = vmatpush1.xpose.msra.mxu0 0.0
  %491 = vmatprep.subr.mxu0 0.0
  %492 = vmatpush1.xpose.msra.mxu0 0.0
  %493 = vmatprep.subr.mxu0 0.0
  %494 = vmatpush1.xpose.msra.mxu0 0.0
  %495 = vmatprep.subr.mxu0 0.0
  %496 = vmatpush1.xpose.msra.mxu0 0.0
  %497 = vmatprep.subr.mxu0 0.0
  %498 = vmatpush1.xpose.msra.mxu0 0.0
  %499 = vmatprep.subr.mxu0 0.0
  %500 = vmatpush1.xpose.msra.mxu0 0.0
  %501 = vmatprep.subr.mxu0 0.0
  %502 = vmatpush1.xpose.msra.mxu0 0.0
  %503 = vmatprep.subr.mxu0 0.0
  %504 = vmatpush1.xpose.msra.mxu0 0.0
  %505 = vmatprep.subr.mxu0 0.0
  %506 = vmatpush1.xpose.msra.mxu0 0.0
  %507 = vmatprep.subr.mxu0 0.0
  %508 = vmatpush1.xpose.msra.mxu0 0.0
  %509 = vmatprep.subr.mxu0 0.0
  %510 = vmatpush1.xpose.msra.mxu0 0.0
  %511 = vmatprep.subr.mxu0 0.0
  %512 = vmatpush1.xpose.msra.mxu0 0.0
  %513 = vmatprep.subr.mxu0 0.0
  %514 = vmatpush1.xpose.msra.mxu0 0.0
  %515 = vmatprep.subr.mxu0 0.0
  %516 = vmatpush1.xpose.msra.mxu0 0.0
  %517 = vmatprep.mubr.f32.mxu0 0.0
  %518 = vmatmul.mubr.f32.gmra.mrb[0].mxu0 %v448
  %v519 = vpop.f32.mrb[0].mxu0
  %v520 = vadd.f32 0.0, %v519
  %v521 = vpop.f32.mrb[0].mxu0
  %522 = vmatprep.mubr.f32.mxu0 0.0
  %523 = vmatmul.mubr.f32.gmra.mrb[0].mxu0 %v451
  %v524 = vpop.f32.mrb[0].mxu0
  %v525 = vadd.f32 0.0, %v524
  %v526 = vpop.f32.mrb[0].mxu0
  %527 = vdwg.mxu0
  %v529 = vsel %vm41, %v37, 0
  %v532 = vsel %vm41, %v38, 0
  %534 = vmatprep.subr.mxu0 0.0
  %535 = vmatpush1.xpose.msra.mxu0 %v529
  %536 = vmatprep.subr.mxu0 0.0
  %537 = vmatpush1.xpose.msra.mxu0 %v532
  %538 = vmatprep.subr.mxu0 0.0
  %539 = vmatpush1.xpose.msra.mxu0 0.0
  %540 = vmatprep.subr.mxu0 0.0
  %541 = vmatpush1.xpose.msra.mxu0 0.0
  %542 = vmatprep.subr.mxu0 0.0
  %543 = vmatpush1.xpose.msra.mxu0 0.0
  %544 = vmatprep.subr.mxu0 0.0
  %545 = vmatpush1.xpose.msra.mxu0 0.0
  %546 = vmatprep.subr.mxu0 0.0
  %547 = vmatpush1.xpose.msra.mxu0 0.0
  %548 = vmatprep.subr.mxu0 0.0
  %549 = vmatpush1.xpose.msra.mxu0 0.0
  %550 = vmatprep.subr.mxu0 0.0
  %551 = vmatpush1.xpose.msra.mxu0 0.0
  %552 = vmatprep.subr.mxu0 0.0
  %553 = vmatpush1.xpose.msra.mxu0 0.0
  %554 = vmatprep.subr.mxu0 0.0
  %555 = vmatpush1.xpose.msra.mxu0 0.0
  %556 = vmatprep.subr.mxu0 0.0
  %557 = vmatpush1.xpose.msra.mxu0 0.0
  %558 = vmatprep.subr.mxu0 0.0
  %559 = vmatpush1.xpose.msra.mxu0 0.0
  %560 = vmatprep.subr.mxu0 0.0
  %561 = vmatpush1.xpose.msra.mxu0 0.0
  %562 = vmatprep.subr.mxu0 0.0
  %563 = vmatpush1.xpose.msra.mxu0 0.0
  %564 = vmatprep.subr.mxu0 0.0
  %565 = vmatpush1.xpose.msra.mxu0 0.0
  %566 = vmatprep.subr.mxu0 0.0
  %567 = vmatpush1.xpose.msra.mxu0 0.0
  %568 = vmatprep.subr.mxu0 0.0
  %569 = vmatpush1.xpose.msra.mxu0 0.0
  %570 = vmatprep.subr.mxu0 0.0
  %571 = vmatpush1.xpose.msra.mxu0 0.0
  %572 = vmatprep.subr.mxu0 0.0
  %573 = vmatpush1.xpose.msra.mxu0 0.0
  %574 = vmatprep.subr.mxu0 0.0
  %575 = vmatpush1.xpose.msra.mxu0 0.0
  %576 = vmatprep.subr.mxu0 0.0
  %577 = vmatpush1.xpose.msra.mxu0 0.0
  %578 = vmatprep.subr.mxu0 0.0
  %579 = vmatpush1.xpose.msra.mxu0 0.0
  %580 = vmatprep.subr.mxu0 0.0
  %581 = vmatpush1.xpose.msra.mxu0 0.0
  %582 = vmatprep.subr.mxu0 0.0
  %583 = vmatpush1.xpose.msra.mxu0 0.0
  %584 = vmatprep.subr.mxu0 0.0
  %585 = vmatpush1.xpose.msra.mxu0 0.0
  %586 = vmatprep.subr.mxu0 0.0
  %587 = vmatpush1.xpose.msra.mxu0 0.0
  %588 = vmatprep.subr.mxu0 0.0
  %589 = vmatpush1.xpose.msra.mxu0 0.0
  %590 = vmatprep.subr.mxu0 0.0
  %591 = vmatpush1.xpose.msra.mxu0 0.0
  %592 = vmatprep.subr.mxu0 0.0
  %593 = vmatpush1.xpose.msra.mxu0 0.0
  %594 = vmatprep.subr.mxu0 0.0
  %595 = vmatpush1.xpose.msra.mxu0 0.0
  %596 = vmatprep.subr.mxu0 0.0
  %597 = vmatpush1.xpose.msra.mxu0 0.0
  %598 = vmatprep.mubr.f32.mxu0 0.0
  %599 = vmatmul.mubr.f32.gmra.mrb[0].mxu0 %v529
  %v600 = vpop.f32.mrb[0].mxu0
  %v601 = vadd.f32 0.0, %v600
  %v602 = vpop.f32.mrb[0].mxu0
  %603 = vmatprep.mubr.f32.mxu0 0.0
  %604 = vmatmul.mubr.f32.gmra.mrb[0].mxu0 %v532
  %v605 = vpop.f32.mrb[0].mxu0
  %v606 = vadd.f32 0.0, %v605
  %v607 = vpop.f32.mrb[0].mxu0
  %608 = vdwg.mxu0
  %v610 = vsel %vm41, %v39, 0
  %v613 = vsel %vm41, %v40, 0
  %615 = vmatprep.subr.mxu0 0.0
  %616 = vmatpush1.xpose.msra.mxu0 %v610
  %617 = vmatprep.subr.mxu0 0.0
  %618 = vmatpush1.xpose.msra.mxu0 %v613
  %619 = vmatprep.subr.mxu0 0.0
  %620 = vmatpush1.xpose.msra.mxu0 0.0
  %621 = vmatprep.subr.mxu0 0.0
  %622 = vmatpush1.xpose.msra.mxu0 0.0
  %623 = vmatprep.subr.mxu0 0.0
  %624 = vmatpush1.xpose.msra.mxu0 0.0
  %625 = vmatprep.subr.mxu0 0.0
  %626 = vmatpush1.xpose.msra.mxu0 0.0
  %627 = vmatprep.subr.mxu0 0.0
  %628 = vmatpush1.xpose.msra.mxu0 0.0
  %629 = vmatprep.subr.mxu0 0.0
  %630 = vmatpush1.xpose.msra.mxu0 0.0
  %631 = vmatprep.subr.mxu0 0.0
  %632 = vmatpush1.xpose.msra.mxu0 0.0
  %633 = vmatprep.subr.mxu0 0.0
  %634 = vmatpush1.xpose.msra.mxu0 0.0
  %635 = vmatprep.subr.mxu0 0.0
  %636 = vmatpush1.xpose.msra.mxu0 0.0
  %637 = vmatprep.subr.mxu0 0.0
  %638 = vmatpush1.xpose.msra.mxu0 0.0
  %639 = vmatprep.subr.mxu0 0.0
  %640 = vmatpush1.xpose.msra.mxu0 0.0
  %641 = vmatprep.subr.mxu0 0.0
  %642 = vmatpush1.xpose.msra.mxu0 0.0
  %643 = vmatprep.subr.mxu0 0.0
  %644 = vmatpush1.xpose.msra.mxu0 0.0
  %645 = vmatprep.subr.mxu0 0.0
  %646 = vmatpush1.xpose.msra.mxu0 0.0
  %647 = vmatprep.subr.mxu0 0.0
  %648 = vmatpush1.xpose.msra.mxu0 0.0
  %649 = vmatprep.subr.mxu0 0.0
  %650 = vmatpush1.xpose.msra.mxu0 0.0
  %651 = vmatprep.subr.mxu0 0.0
  %652 = vmatpush1.xpose.msra.mxu0 0.0
  %653 = vmatprep.subr.mxu0 0.0
  %654 = vmatpush1.xpose.msra.mxu0 0.0
  %655 = vmatprep.subr.mxu0 0.0
  %656 = vmatpush1.xpose.msra.mxu0 0.0
  %657 = vmatprep.subr.mxu0 0.0
  %658 = vmatpush1.xpose.msra.mxu0 0.0
  %659 = vmatprep.subr.mxu0 0.0
  %660 = vmatpush1.xpose.msra.mxu0 0.0
  %661 = vmatprep.subr.mxu0 0.0
  %662 = vmatpush1.xpose.msra.mxu0 0.0
  %663 = vmatprep.subr.mxu0 0.0
  %664 = vmatpush1.xpose.msra.mxu0 0.0
  %665 = vmatprep.subr.mxu0 0.0
  %666 = vmatpush1.xpose.msra.mxu0 0.0
  %667 = vmatprep.subr.mxu0 0.0
  %668 = vmatpush1.xpose.msra.mxu0 0.0
  %669 = vmatprep.subr.mxu0 0.0
  %670 = vmatpush1.xpose.msra.mxu0 0.0
  %671 = vmatprep.subr.mxu0 0.0
  %672 = vmatpush1.xpose.msra.mxu0 0.0
  %673 = vmatprep.subr.mxu0 0.0
  %674 = vmatpush1.xpose.msra.mxu0 0.0
  %675 = vmatprep.subr.mxu0 0.0
  %676 = vmatpush1.xpose.msra.mxu0 0.0
  %677 = vmatprep.subr.mxu0 0.0
  %678 = vmatpush1.xpose.msra.mxu0 0.0
  %679 = vmatprep.mubr.f32.mxu0 0.0
  %680 = vmatmul.mubr.f32.gmra.mrb[0].mxu0 %v610
  %v681 = vpop.f32.mrb[0].mxu0
  %v682 = vadd.f32 0.0, %v681
  %v683 = vpop.f32.mrb[0].mxu0
  %684 = vmatprep.mubr.f32.mxu0 0.0
  %685 = vmatmul.mubr.f32.gmra.mrb[0].mxu0 %v613
  %v686 = vpop.f32.mrb[0].mxu0
  %v687 = vadd.f32 0.0, %v686
  %v688 = vpop.f32.mrb[0].mxu0
  %689 = vdwg.mxu0
  %v691 = vsel %vm41, %v8, 0
  %v694 = vsel %vm41, %v9, 0
  %696 = vmatprep.subr.mxu0 0.0
  %697 = vmatpush1.xpose.msra.mxu0 %v691
  %698 = vmatprep.subr.mxu0 0.0
  %699 = vmatpush1.xpose.msra.mxu0 %v694
  %700 = vmatprep.subr.mxu0 0.0
  %701 = vmatpush1.xpose.msra.mxu0 0.0
  %702 = vmatprep.subr.mxu0 0.0
  %703 = vmatpush1.xpose.msra.mxu0 0.0
  %704 = vmatprep.subr.mxu0 0.0
  %705 = vmatpush1.xpose.msra.mxu0 0.0
  %706 = vmatprep.subr.mxu0 0.0
  %707 = vmatpush1.xpose.msra.mxu0 0.0
  %708 = vmatprep.subr.mxu0 0.0
  %709 = vmatpush1.xpose.msra.mxu0 0.0
  %710 = vmatprep.subr.mxu0 0.0
  %711 = vmatpush1.xpose.msra.mxu0 0.0
  %712 = vmatprep.subr.mxu0 0.0
  %713 = vmatpush1.xpose.msra.mxu0 0.0
  %714 = vmatprep.subr.mxu0 0.0
  %715 = vmatpush1.xpose.msra.mxu0 0.0
  %716 = vmatprep.subr.mxu0 0.0
  %717 = vmatpush1.xpose.msra.mxu0 0.0
  %718 = vmatprep.subr.mxu0 0.0
  %719 = vmatpush1.xpose.msra.mxu0 0.0
  %720 = vmatprep.subr.mxu0 0.0
  %721 = vmatpush1.xpose.msra.mxu0 0.0
  %722 = vmatprep.subr.mxu0 0.0
  %723 = vmatpush1.xpose.msra.mxu0 0.0
  %724 = vmatprep.subr.mxu0 0.0
  %725 = vmatpush1.xpose.msra.mxu0 0.0
  %726 = vmatprep.subr.mxu0 0.0
  %727 = vmatpush1.xpose.msra.mxu0 0.0
  %728 = vmatprep.subr.mxu0 0.0
  %729 = vmatpush1.xpose.msra.mxu0 0.0
  %730 = vmatprep.subr.mxu0 0.0
  %731 = vmatpush1.xpose.msra.mxu0 0.0
  %732 = vmatprep.subr.mxu0 0.0
  %733 = vmatpush1.xpose.msra.mxu0 0.0
  %734 = vmatprep.subr.mxu0 0.0
  %735 = vmatpush1.xpose.msra.mxu0 0.0
  %736 = vmatprep.subr.mxu0 0.0
  %737 = vmatpush1.xpose.msra.mxu0 0.0
  %738 = vmatprep.subr.mxu0 0.0
  %739 = vmatpush1.xpose.msra.mxu0 0.0
  %740 = vmatprep.subr.mxu0 0.0
  %741 = vmatpush1.xpose.msra.mxu0 0.0
  %742 = vmatprep.subr.mxu0 0.0
  %743 = vmatpush1.xpose.msra.mxu0 0.0
  %744 = vmatprep.subr.mxu0 0.0
  %745 = vmatpush1.xpose.msra.mxu0 0.0
  %746 = vmatprep.subr.mxu0 0.0
  %747 = vmatpush1.xpose.msra.mxu0 0.0
  %748 = vmatprep.subr.mxu0 0.0
  %749 = vmatpush1.xpose.msra.mxu0 0.0
  %750 = vmatprep.subr.mxu0 0.0
  %751 = vmatpush1.xpose.msra.mxu0 0.0
  %752 = vmatprep.subr.mxu0 0.0
  %753 = vmatpush1.xpose.msra.mxu0 0.0
  %754 = vmatprep.subr.mxu0 0.0
  %755 = vmatpush1.xpose.msra.mxu0 0.0
  %756 = vmatprep.subr.mxu0 0.0
  %757 = vmatpush1.xpose.msra.mxu0 0.0
  %758 = vmatprep.subr.mxu0 0.0
  %759 = vmatpush1.xpose.msra.mxu0 0.0
  %760 = vmatprep.mubr.f32.mxu0 0.0
  %761 = vmatmul.mubr.f32.gmra.mrb[0].mxu0 %v691
  %v762 = vpop.f32.mrb[0].mxu0
  %v763 = vadd.f32 %v115, %v762
  %v764 = vpop.f32.mrb[0].mxu0
  %765 = vmatprep.mubr.f32.mxu0 0.0
  %766 = vmatmul.mubr.f32.gmra.mrb[0].mxu0 %v694
  %v767 = vpop.f32.mrb[0].mxu0
  %v768 = vadd.f32 %v120, %v767
  %v769 = vpop.f32.mrb[0].mxu0
  %770 = vdwg.mxu0
  %v772 = vsel %vm41, %v10, 0
  %v775 = vsel %vm41, %v11, 0
  %777 = vmatprep.subr.mxu0 0.0
  %778 = vmatpush1.xpose.msra.mxu0 %v772
  %779 = vmatprep.subr.mxu0 0.0
  %780 = vmatpush1.xpose.msra.mxu0 %v775
  %781 = vmatprep.subr.mxu0 0.0
  %782 = vmatpush1.xpose.msra.mxu0 0.0
  %783 = vmatprep.subr.mxu0 0.0
  %784 = vmatpush1.xpose.msra.mxu0 0.0
  %785 = vmatprep.subr.mxu0 0.0
  %786 = vmatpush1.xpose.msra.mxu0 0.0
  %787 = vmatprep.subr.mxu0 0.0
  %788 = vmatpush1.xpose.msra.mxu0 0.0
  %789 = vmatprep.subr.mxu0 0.0
  %790 = vmatpush1.xpose.msra.mxu0 0.0
  %791 = vmatprep.subr.mxu0 0.0
  %792 = vmatpush1.xpose.msra.mxu0 0.0
  %793 = vmatprep.subr.mxu0 0.0
  %794 = vmatpush1.xpose.msra.mxu0 0.0
  %795 = vmatprep.subr.mxu0 0.0
  %796 = vmatpush1.xpose.msra.mxu0 0.0
  %797 = vmatprep.subr.mxu0 0.0
  %798 = vmatpush1.xpose.msra.mxu0 0.0
  %799 = vmatprep.subr.mxu0 0.0
  %800 = vmatpush1.xpose.msra.mxu0 0.0
  %801 = vmatprep.subr.mxu0 0.0
  %802 = vmatpush1.xpose.msra.mxu0 0.0
  %803 = vmatprep.subr.mxu0 0.0
  %804 = vmatpush1.xpose.msra.mxu0 0.0
  %805 = vmatprep.subr.mxu0 0.0
  %806 = vmatpush1.xpose.msra.mxu0 0.0
  %807 = vmatprep.subr.mxu0 0.0
  %808 = vmatpush1.xpose.msra.mxu0 0.0
  %809 = vmatprep.subr.mxu0 0.0
  %810 = vmatpush1.xpose.msra.mxu0 0.0
  %811 = vmatprep.subr.mxu0 0.0
  %812 = vmatpush1.xpose.msra.mxu0 0.0
  %813 = vmatprep.subr.mxu0 0.0
  %814 = vmatpush1.xpose.msra.mxu0 0.0
  %815 = vmatprep.subr.mxu0 0.0
  %816 = vmatpush1.xpose.msra.mxu0 0.0
  %817 = vmatprep.subr.mxu0 0.0
  %818 = vmatpush1.xpose.msra.mxu0 0.0
  %819 = vmatprep.subr.mxu0 0.0
  %820 = vmatpush1.xpose.msra.mxu0 0.0
  %821 = vmatprep.subr.mxu0 0.0
  %822 = vmatpush1.xpose.msra.mxu0 0.0
  %823 = vmatprep.subr.mxu0 0.0
  %824 = vmatpush1.xpose.msra.mxu0 0.0
  %825 = vmatprep.subr.mxu0 0.0
  %826 = vmatpush1.xpose.msra.mxu0 0.0
  %827 = vmatprep.subr.mxu0 0.0
  %828 = vmatpush1.xpose.msra.mxu0 0.0
  %829 = vmatprep.subr.mxu0 0.0
  %830 = vmatpush1.xpose.msra.mxu0 0.0
  %831 = vmatprep.subr.mxu0 0.0
  %832 = vmatpush1.xpose.msra.mxu0 0.0
  %833 = vmatprep.subr.mxu0 0.0
  %834 = vmatpush1.xpose.msra.mxu0 0.0
  %835 = vmatprep.subr.mxu0 0.0
  %836 = vmatpush1.xpose.msra.mxu0 0.0
  %837 = vmatprep.subr.mxu0 0.0
  %838 = vmatpush1.xpose.msra.mxu0 0.0
  %839 = vmatprep.subr.mxu0 0.0
  %840 = vmatpush1.xpose.msra.mxu0 0.0
  %841 = vmatprep.mubr.f32.mxu0 0.0
  %842 = vmatmul.mubr.f32.gmra.mrb[0].mxu0 %v772
  %v843 = vpop.f32.mrb[0].mxu0
  %v844 = vadd.f32 %v196, %v843
  %v845 = vpop.f32.mrb[0].mxu0
  %846 = vmatprep.mubr.f32.mxu0 0.0
  %847 = vmatmul.mubr.f32.gmra.mrb[0].mxu0 %v775
  %v848 = vpop.f32.mrb[0].mxu0
  %v849 = vadd.f32 %v201, %v848
  %v850 = vpop.f32.mrb[0].mxu0
  %851 = vdwg.mxu0
  %v853 = vsel %vm41, %v12, 0
  %v856 = vsel %vm41, %v13, 0
  %858 = vmatprep.subr.mxu0 0.0
  %859 = vmatpush1.xpose.msra.mxu0 %v853
  %860 = vmatprep.subr.mxu0 0.0
  %861 = vmatpush1.xpose.msra.mxu0 %v856
  %862 = vmatprep.subr.mxu0 0.0
  %863 = vmatpush1.xpose.msra.mxu0 0.0
  %864 = vmatprep.subr.mxu0 0.0
  %865 = vmatpush1.xpose.msra.mxu0 0.0
  %866 = vmatprep.subr.mxu0 0.0
  %867 = vmatpush1.xpose.msra.mxu0 0.0
  %868 = vmatprep.subr.mxu0 0.0
  %869 = vmatpush1.xpose.msra.mxu0 0.0
  %870 = vmatprep.subr.mxu0 0.0
  %871 = vmatpush1.xpose.msra.mxu0 0.0
  %872 = vmatprep.subr.mxu0 0.0
  %873 = vmatpush1.xpose.msra.mxu0 0.0
  %874 = vmatprep.subr.mxu0 0.0
  %875 = vmatpush1.xpose.msra.mxu0 0.0
  %876 = vmatprep.subr.mxu0 0.0
  %877 = vmatpush1.xpose.msra.mxu0 0.0
  %878 = vmatprep.subr.mxu0 0.0
  %879 = vmatpush1.xpose.msra.mxu0 0.0
  %880 = vmatprep.subr.mxu0 0.0
  %881 = vmatpush1.xpose.msra.mxu0 0.0
  %882 = vmatprep.subr.mxu0 0.0
  %883 = vmatpush1.xpose.msra.mxu0 0.0
  %884 = vmatprep.subr.mxu0 0.0
  %885 = vmatpush1.xpose.msra.mxu0 0.0
  %886 = vmatprep.subr.mxu0 0.0
  %887 = vmatpush1.xpose.msra.mxu0 0.0
  %888 = vmatprep.subr.mxu0 0.0
  %889 = vmatpush1.xpose.msra.mxu0 0.0
  %890 = vmatprep.subr.mxu0 0.0
  %891 = vmatpush1.xpose.msra.mxu0 0.0
  %892 = vmatprep.subr.mxu0 0.0
  %893 = vmatpush1.xpose.msra.mxu0 0.0
  %894 = vmatprep.subr.mxu0 0.0
  %895 = vmatpush1.xpose.msra.mxu0 0.0
  %896 = vmatprep.subr.mxu0 0.0
  %897 = vmatpush1.xpose.msra.mxu0 0.0
  %898 = vmatprep.subr.mxu0 0.0
  %899 = vmatpush1.xpose.msra.mxu0 0.0
  %900 = vmatprep.subr.mxu0 0.0
  %901 = vmatpush1.xpose.msra.mxu0 0.0
  %902 = vmatprep.subr.mxu0 0.0
  %903 = vmatpush1.xpose.msra.mxu0 0.0
  %904 = vmatprep.subr.mxu0 0.0
  %905 = vmatpush1.xpose.msra.mxu0 0.0
  %906 = vmatprep.subr.mxu0 0.0
  %907 = vmatpush1.xpose.msra.mxu0 0.0
  %908 = vmatprep.subr.mxu0 0.0
  %909 = vmatpush1.xpose.msra.mxu0 0.0
  %910 = vmatprep.subr.mxu0 0.0
  %911 = vmatpush1.xpose.msra.mxu0 0.0
  %912 = vmatprep.subr.mxu0 0.0
  %913 = vmatpush1.xpose.msra.mxu0 0.0
  %914 = vmatprep.subr.mxu0 0.0
  %915 = vmatpush1.xpose.msra.mxu0 0.0
  %916 = vmatprep.subr.mxu0 0.0
  %917 = vmatpush1.xpose.msra.mxu0 0.0
  %918 = vmatprep.subr.mxu0 0.0
  %919 = vmatpush1.xpose.msra.mxu0 0.0
  %920 = vmatprep.subr.mxu0 0.0
  %921 = vmatpush1.xpose.msra.mxu0 0.0
  %922 = vmatprep.mubr.f32.mxu0 0.0
  %923 = vmatmul.mubr.f32.gmra.mrb[0].mxu0 %v853
  %v924 = vpop.f32.mrb[0].mxu0
  %v925 = vadd.f32 %v277, %v924
  %v926 = vpop.f32.mrb[0].mxu0
  %927 = vmatprep.mubr.f32.mxu0 0.0
  %928 = vmatmul.mubr.f32.gmra.mrb[0].mxu0 %v856
  %v929 = vpop.f32.mrb[0].mxu0
  %v930 = vadd.f32 %v282, %v929
  %v931 = vpop.f32.mrb[0].mxu0
  %932 = vdwg.mxu0
  %v934 = vsel %vm41, %v14, 0
  %v937 = vsel %vm41, %v15, 0
  %939 = vmatprep.subr.mxu0 0.0
  %940 = vmatpush1.xpose.msra.mxu0 %v934
  %941 = vmatprep.subr.mxu0 0.0
  %942 = vmatpush1.xpose.msra.mxu0 %v937
  %943 = vmatprep.subr.mxu0 0.0
  %944 = vmatpush1.xpose.msra.mxu0 0.0
  %945 = vmatprep.subr.mxu0 0.0
  %946 = vmatpush1.xpose.msra.mxu0 0.0
  %947 = vmatprep.subr.mxu0 0.0
  %948 = vmatpush1.xpose.msra.mxu0 0.0
  %949 = vmatprep.subr.mxu0 0.0
  %950 = vmatpush1.xpose.msra.mxu0 0.0
  %951 = vmatprep.subr.mxu0 0.0
  %952 = vmatpush1.xpose.msra.mxu0 0.0
  %953 = vmatprep.subr.mxu0 0.0
  %954 = vmatpush1.xpose.msra.mxu0 0.0
  %955 = vmatprep.subr.mxu0 0.0
  %956 = vmatpush1.xpose.msra.mxu0 0.0
  %957 = vmatprep.subr.mxu0 0.0
  %958 = vmatpush1.xpose.msra.mxu0 0.0
  %959 = vmatprep.subr.mxu0 0.0
  %960 = vmatpush1.xpose.msra.mxu0 0.0
  %961 = vmatprep.subr.mxu0 0.0
  %962 = vmatpush1.xpose.msra.mxu0 0.0
  %963 = vmatprep.subr.mxu0 0.0
  %964 = vmatpush1.xpose.msra.mxu0 0.0
  %965 = vmatprep.subr.mxu0 0.0
  %966 = vmatpush1.xpose.msra.mxu0 0.0
  %967 = vmatprep.subr.mxu0 0.0
  %968 = vmatpush1.xpose.msra.mxu0 0.0
  %969 = vmatprep.subr.mxu0 0.0
  %970 = vmatpush1.xpose.msra.mxu0 0.0
  %971 = vmatprep.subr.mxu0 0.0
  %972 = vmatpush1.xpose.msra.mxu0 0.0
  %973 = vmatprep.subr.mxu0 0.0
  %974 = vmatpush1.xpose.msra.mxu0 0.0
  %975 = vmatprep.subr.mxu0 0.0
  %976 = vmatpush1.xpose.msra.mxu0 0.0
  %977 = vmatprep.subr.mxu0 0.0
  %978 = vmatpush1.xpose.msra.mxu0 0.0
  %979 = vmatprep.subr.mxu0 0.0
  %980 = vmatpush1.xpose.msra.mxu0 0.0
  %981 = vmatprep.subr.mxu0 0.0
  %982 = vmatpush1.xpose.msra.mxu0 0.0
  %983 = vmatprep.subr.mxu0 0.0
  %984 = vmatpush1.xpose.msra.mxu0 0.0
  %985 = vmatprep.subr.mxu0 0.0
  %986 = vmatpush1.xpose.msra.mxu0 0.0
  %987 = vmatprep.subr.mxu0 0.0
  %988 = vmatpush1.xpose.msra.mxu0 0.0
  %989 = vmatprep.subr.mxu0 0.0
  %990 = vmatpush1.xpose.msra.mxu0 0.0
  %991 = vmatprep.subr.mxu0 0.0
  %992 = vmatpush1.xpose.msra.mxu0 0.0
  %993 = vmatprep.subr.mxu0 0.0
  %994 = vmatpush1.xpose.msra.mxu0 0.0
  %995 = vmatprep.subr.mxu0 0.0
  %996 = vmatpush1.xpose.msra.mxu0 0.0
  %997 = vmatprep.subr.mxu0 0.0
  %998 = vmatpush1.xpose.msra.mxu0 0.0
  %999 = vmatprep.subr.mxu0 0.0
  %1000 = vmatpush1.xpose.msra.mxu0 0.0
  %1001 = vmatprep.subr.mxu0 0.0
  %1002 = vmatpush1.xpose.msra.mxu0 0.0
  %1003 = vmatprep.mubr.f32.mxu0 0.0
  %1004 = vmatmul.mubr.f32.gmra.mrb[0].mxu0 %v934
  %v1005 = vpop.f32.mrb[0].mxu0
  %v1006 = vadd.f32 %v358, %v1005
  %v1007 = vpop.f32.mrb[0].mxu0
  %1008 = vmatprep.mubr.f32.mxu0 0.0
  %1009 = vmatmul.mubr.f32.gmra.mrb[0].mxu0 %v937
  %v1010 = vpop.f32.mrb[0].mxu0
  %v1011 = vadd.f32 %v363, %v1010
  %v1012 = vpop.f32.mrb[0].mxu0
  %1013 = vdwg.mxu0
  %v1015 = vsel %vm41, %v16, 0
  %v1018 = vsel %vm41, %v17, 0
  %1020 = vmatprep.subr.mxu0 0.0
  %1021 = vmatpush1.xpose.msra.mxu0 %v1015
  %1022 = vmatprep.subr.mxu0 0.0
  %1023 = vmatpush1.xpose.msra.mxu0 %v1018
  %1024 = vmatprep.subr.mxu0 0.0
  %1025 = vmatpush1.xpose.msra.mxu0 0.0
  %1026 = vmatprep.subr.mxu0 0.0
  %1027 = vmatpush1.xpose.msra.mxu0 0.0
  %1028 = vmatprep.subr.mxu0 0.0
  %1029 = vmatpush1.xpose.msra.mxu0 0.0
  %1030 = vmatprep.subr.mxu0 0.0
  %1031 = vmatpush1.xpose.msra.mxu0 0.0
  %1032 = vmatprep.subr.mxu0 0.0
  %1033 = vmatpush1.xpose.msra.mxu0 0.0
  %1034 = vmatprep.subr.mxu0 0.0
  %1035 = vmatpush1.xpose.msra.mxu0 0.0
  %1036 = vmatprep.subr.mxu0 0.0
  %1037 = vmatpush1.xpose.msra.mxu0 0.0
  %1038 = vmatprep.subr.mxu0 0.0
  %1039 = vmatpush1.xpose.msra.mxu0 0.0
  %1040 = vmatprep.subr.mxu0 0.0
  %1041 = vmatpush1.xpose.msra.mxu0 0.0
  %1042 = vmatprep.subr.mxu0 0.0
  %1043 = vmatpush1.xpose.msra.mxu0 0.0
  %1044 = vmatprep.subr.mxu0 0.0
  %1045 = vmatpush1.xpose.msra.mxu0 0.0
  %1046 = vmatprep.subr.mxu0 0.0
  %1047 = vmatpush1.xpose.msra.mxu0 0.0
  %1048 = vmatprep.subr.mxu0 0.0
  %1049 = vmatpush1.xpose.msra.mxu0 0.0
  %1050 = vmatprep.subr.mxu0 0.0
  %1051 = vmatpush1.xpose.msra.mxu0 0.0
  %1052 = vmatprep.subr.mxu0 0.0
  %1053 = vmatpush1.xpose.msra.mxu0 0.0
  %1054 = vmatprep.subr.mxu0 0.0
  %1055 = vmatpush1.xpose.msra.mxu0 0.0
  %1056 = vmatprep.subr.mxu0 0.0
  %1057 = vmatpush1.xpose.msra.mxu0 0.0
  %1058 = vmatprep.subr.mxu0 0.0
  %1059 = vmatpush1.xpose.msra.mxu0 0.0
  %1060 = vmatprep.subr.mxu0 0.0
  %1061 = vmatpush1.xpose.msra.mxu0 0.0
  %1062 = vmatprep.subr.mxu0 0.0
  %1063 = vmatpush1.xpose.msra.mxu0 0.0
  %1064 = vmatprep.subr.mxu0 0.0
  %1065 = vmatpush1.xpose.msra.mxu0 0.0
  %1066 = vmatprep.subr.mxu0 0.0
  %1067 = vmatpush1.xpose.msra.mxu0 0.0
  %1068 = vmatprep.subr.mxu0 0.0
  %1069 = vmatpush1.xpose.msra.mxu0 0.0
  %1070 = vmatprep.subr.mxu0 0.0
  %1071 = vmatpush1.xpose.msra.mxu0 0.0
  %1072 = vmatprep.subr.mxu0 0.0
  %1073 = vmatpush1.xpose.msra.mxu0 0.0
  %1074 = vmatprep.subr.mxu0 0.0
  %1075 = vmatpush1.xpose.msra.mxu0 0.0
  %1076 = vmatprep.subr.mxu0 0.0
  %1077 = vmatpush1.xpose.msra.mxu0 0.0
  %1078 = vmatprep.subr.mxu0 0.0
  %1079 = vmatpush1.xpose.msra.mxu0 0.0
  %1080 = vmatprep.subr.mxu0 0.0
  %1081 = vmatpush1.xpose.msra.mxu0 0.0
  %1082 = vmatprep.subr.mxu0 0.0
  %1083 = vmatpush1.xpose.msra.mxu0 0.0
  %1084 = vmatprep.mubr.f32.mxu0 0.0
  %1085 = vmatmul.mubr.f32.gmra.mrb[0].mxu0 %v1015
  %v1086 = vpop.f32.mrb[0].mxu0
  %v1087 = vadd.f32 %v439, %v1086
  %v1088 = vpop.f32.mrb[0].mxu0
  %1089 = vmatprep.mubr.f32.mxu0 0.0
  %1090 = vmatmul.mubr.f32.gmra.mrb[0].mxu0 %v1018
  %v1091 = vpop.f32.mrb[0].mxu0
  %v1092 = vadd.f32 %v444, %v1091
  %v1093 = vpop.f32.mrb[0].mxu0
  %1094 = vdwg.mxu0
  %v1096 = vsel %vm41, %v18, 0
  %v1099 = vsel %vm41, %v19, 0
  %1101 = vmatprep.subr.mxu0 0.0
  %1102 = vmatpush1.xpose.msra.mxu0 %v1096
  %1103 = vmatprep.subr.mxu0 0.0
  %1104 = vmatpush1.xpose.msra.mxu0 %v1099
  %1105 = vmatprep.subr.mxu0 0.0
  %1106 = vmatpush1.xpose.msra.mxu0 0.0
  %1107 = vmatprep.subr.mxu0 0.0
  %1108 = vmatpush1.xpose.msra.mxu0 0.0
  %1109 = vmatprep.subr.mxu0 0.0
  %1110 = vmatpush1.xpose.msra.mxu0 0.0
  %1111 = vmatprep.subr.mxu0 0.0
  %1112 = vmatpush1.xpose.msra.mxu0 0.0
  %1113 = vmatprep.subr.mxu0 0.0
  %1114 = vmatpush1.xpose.msra.mxu0 0.0
  %1115 = vmatprep.subr.mxu0 0.0
  %1116 = vmatpush1.xpose.msra.mxu0 0.0
  %1117 = vmatprep.subr.mxu0 0.0
  %1118 = vmatpush1.xpose.msra.mxu0 0.0
  %1119 = vmatprep.subr.mxu0 0.0
  %1120 = vmatpush1.xpose.msra.mxu0 0.0
  %1121 = vmatprep.subr.mxu0 0.0
  %1122 = vmatpush1.xpose.msra.mxu0 0.0
  %1123 = vmatprep.subr.mxu0 0.0
  %1124 = vmatpush1.xpose.msra.mxu0 0.0
  %1125 = vmatprep.subr.mxu0 0.0
  %1126 = vmatpush1.xpose.msra.mxu0 0.0
  %1127 = vmatprep.subr.mxu0 0.0
  %1128 = vmatpush1.xpose.msra.mxu0 0.0
  %1129 = vmatprep.subr.mxu0 0.0
  %1130 = vmatpush1.xpose.msra.mxu0 0.0
  %1131 = vmatprep.subr.mxu0 0.0
  %1132 = vmatpush1.xpose.msra.mxu0 0.0
  %1133 = vmatprep.subr.mxu0 0.0
  %1134 = vmatpush1.xpose.msra.mxu0 0.0
  %1135 = vmatprep.subr.mxu0 0.0
  %1136 = vmatpush1.xpose.msra.mxu0 0.0
  %1137 = vmatprep.subr.mxu0 0.0
  %1138 = vmatpush1.xpose.msra.mxu0 0.0
  %1139 = vmatprep.subr.mxu0 0.0
  %1140 = vmatpush1.xpose.msra.mxu0 0.0
  %1141 = vmatprep.subr.mxu0 0.0
  %1142 = vmatpush1.xpose.msra.mxu0 0.0
  %1143 = vmatprep.subr.mxu0 0.0
  %1144 = vmatpush1.xpose.msra.mxu0 0.0
  %1145 = vmatprep.subr.mxu0 0.0
  %1146 = vmatpush1.xpose.msra.mxu0 0.0
  %1147 = vmatprep.subr.mxu0 0.0
  %1148 = vmatpush1.xpose.msra.mxu0 0.0
  %1149 = vmatprep.subr.mxu0 0.0
  %1150 = vmatpush1.xpose.msra.mxu0 0.0
  %1151 = vmatprep.subr.mxu0 0.0
  %1152 = vmatpush1.xpose.msra.mxu0 0.0
  %1153 = vmatprep.subr.mxu0 0.0
  %1154 = vmatpush1.xpose.msra.mxu0 0.0
  %1155 = vmatprep.subr.mxu0 0.0
  %1156 = vmatpush1.xpose.msra.mxu0 0.0
  %1157 = vmatprep.subr.mxu0 0.0
  %1158 = vmatpush1.xpose.msra.mxu0 0.0
  %1159 = vmatprep.subr.mxu0 0.0
  %1160 = vmatpush1.xpose.msra.mxu0 0.0
  %1161 = vmatprep.subr.mxu0 0.0
  %1162 = vmatpush1.xpose.msra.mxu0 0.0
  %1163 = vmatprep.subr.mxu0 0.0
  %1164 = vmatpush1.xpose.msra.mxu0 0.0
  %1165 = vmatprep.mubr.f32.mxu0 0.0
  %1166 = vmatmul.mubr.f32.gmra.mrb[0].mxu0 %v1096
  %v1167 = vpop.f32.mrb[0].mxu0
  %v1168 = vadd.f32 %v520, %v1167
  %v1169 = vpop.f32.mrb[0].mxu0
  %1170 = vmatprep.mubr.f32.mxu0 0.0
  %1171 = vmatmul.mubr.f32.gmra.mrb[0].mxu0 %v1099
  %v1172 = vpop.f32.mrb[0].mxu0
  %v1173 = vadd.f32 %v525, %v1172
  %v1174 = vpop.f32.mrb[0].mxu0
  %1175 = vdwg.mxu0
  %v1177 = vsel %vm41, %v20, 0
  %v1180 = vsel %vm41, %v21, 0
  %1182 = vmatprep.subr.mxu0 0.0
  %1183 = vmatpush1.xpose.msra.mxu0 %v1177
  %1184 = vmatprep.subr.mxu0 0.0
  %1185 = vmatpush1.xpose.msra.mxu0 %v1180
  %1186 = vmatprep.subr.mxu0 0.0
  %1187 = vmatpush1.xpose.msra.mxu0 0.0
  %1188 = vmatprep.subr.mxu0 0.0
  %1189 = vmatpush1.xpose.msra.mxu0 0.0
  %1190 = vmatprep.subr.mxu0 0.0
  %1191 = vmatpush1.xpose.msra.mxu0 0.0
  %1192 = vmatprep.subr.mxu0 0.0
  %1193 = vmatpush1.xpose.msra.mxu0 0.0
  %1194 = vmatprep.subr.mxu0 0.0
  %1195 = vmatpush1.xpose.msra.mxu0 0.0
  %1196 = vmatprep.subr.mxu0 0.0
  %1197 = vmatpush1.xpose.msra.mxu0 0.0
  %1198 = vmatprep.subr.mxu0 0.0
  %1199 = vmatpush1.xpose.msra.mxu0 0.0
  %1200 = vmatprep.subr.mxu0 0.0
  %1201 = vmatpush1.xpose.msra.mxu0 0.0
  %1202 = vmatprep.subr.mxu0 0.0
  %1203 = vmatpush1.xpose.msra.mxu0 0.0
  %1204 = vmatprep.subr.mxu0 0.0
  %1205 = vmatpush1.xpose.msra.mxu0 0.0
  %1206 = vmatprep.subr.mxu0 0.0
  %1207 = vmatpush1.xpose.msra.mxu0 0.0
  %1208 = vmatprep.subr.mxu0 0.0
  %1209 = vmatpush1.xpose.msra.mxu0 0.0
  %1210 = vmatprep.subr.mxu0 0.0
  %1211 = vmatpush1.xpose.msra.mxu0 0.0
  %1212 = vmatprep.subr.mxu0 0.0
  %1213 = vmatpush1.xpose.msra.mxu0 0.0
  %1214 = vmatprep.subr.mxu0 0.0
  %1215 = vmatpush1.xpose.msra.mxu0 0.0
  %1216 = vmatprep.subr.mxu0 0.0
  %1217 = vmatpush1.xpose.msra.mxu0 0.0
  %1218 = vmatprep.subr.mxu0 0.0
  %1219 = vmatpush1.xpose.msra.mxu0 0.0
  %1220 = vmatprep.subr.mxu0 0.0
  %1221 = vmatpush1.xpose.msra.mxu0 0.0
  %1222 = vmatprep.subr.mxu0 0.0
  %1223 = vmatpush1.xpose.msra.mxu0 0.0
  %1224 = vmatprep.subr.mxu0 0.0
  %1225 = vmatpush1.xpose.msra.mxu0 0.0
  %1226 = vmatprep.subr.mxu0 0.0
  %1227 = vmatpush1.xpose.msra.mxu0 0.0
  %1228 = vmatprep.subr.mxu0 0.0
  %1229 = vmatpush1.xpose.msra.mxu0 0.0
  %1230 = vmatprep.subr.mxu0 0.0
  %1231 = vmatpush1.xpose.msra.mxu0 0.0
  %1232 = vmatprep.subr.mxu0 0.0
  %1233 = vmatpush1.xpose.msra.mxu0 0.0
  %1234 = vmatprep.subr.mxu0 0.0
  %1235 = vmatpush1.xpose.msra.mxu0 0.0
  %1236 = vmatprep.subr.mxu0 0.0
  %1237 = vmatpush1.xpose.msra.mxu0 0.0
  %1238 = vmatprep.subr.mxu0 0.0
  %1239 = vmatpush1.xpose.msra.mxu0 0.0
  %1240 = vmatprep.subr.mxu0 0.0
  %1241 = vmatpush1.xpose.msra.mxu0 0.0
  %1242 = vmatprep.subr.mxu0 0.0
  %1243 = vmatpush1.xpose.msra.mxu0 0.0
  %1244 = vmatprep.subr.mxu0 0.0
  %1245 = vmatpush1.xpose.msra.mxu0 0.0
  %1246 = vmatprep.mubr.f32.mxu0 0.0
  %1247 = vmatmul.mubr.f32.gmra.mrb[0].mxu0 %v1177
  %v1248 = vpop.f32.mrb[0].mxu0
  %v1249 = vadd.f32 %v601, %v1248
  %v1250 = vpop.f32.mrb[0].mxu0
  %1251 = vmatprep.mubr.f32.mxu0 0.0
  %1252 = vmatmul.mubr.f32.gmra.mrb[0].mxu0 %v1180
  %v1253 = vpop.f32.mrb[0].mxu0
  %v1254 = vadd.f32 %v606, %v1253
  %v1255 = vpop.f32.mrb[0].mxu0
  %1256 = vdwg.mxu0
  %v1258 = vsel %vm41, %v22, 0
  %v1261 = vsel %vm41, %v23, 0
  %1263 = vmatprep.subr.mxu0 0.0
  %1264 = vmatpush1.xpose.msra.mxu0 %v1258
  %1265 = vmatprep.subr.mxu0 0.0
  %1266 = vmatpush1.xpose.msra.mxu0 %v1261
  %1267 = vmatprep.subr.mxu0 0.0
  %1268 = vmatpush1.xpose.msra.mxu0 0.0
  %1269 = vmatprep.subr.mxu0 0.0
  %1270 = vmatpush1.xpose.msra.mxu0 0.0
  %1271 = vmatprep.subr.mxu0 0.0
  %1272 = vmatpush1.xpose.msra.mxu0 0.0
  %1273 = vmatprep.subr.mxu0 0.0
  %1274 = vmatpush1.xpose.msra.mxu0 0.0
  %1275 = vmatprep.subr.mxu0 0.0
  %1276 = vmatpush1.xpose.msra.mxu0 0.0
  %1277 = vmatprep.subr.mxu0 0.0
  %1278 = vmatpush1.xpose.msra.mxu0 0.0
  %1279 = vmatprep.subr.mxu0 0.0
  %1280 = vmatpush1.xpose.msra.mxu0 0.0
  %1281 = vmatprep.subr.mxu0 0.0
  %1282 = vmatpush1.xpose.msra.mxu0 0.0
  %1283 = vmatprep.subr.mxu0 0.0
  %1284 = vmatpush1.xpose.msra.mxu0 0.0
  %1285 = vmatprep.subr.mxu0 0.0
  %1286 = vmatpush1.xpose.msra.mxu0 0.0
  %1287 = vmatprep.subr.mxu0 0.0
  %1288 = vmatpush1.xpose.msra.mxu0 0.0
  %1289 = vmatprep.subr.mxu0 0.0
  %1290 = vmatpush1.xpose.msra.mxu0 0.0
  %1291 = vmatprep.subr.mxu0 0.0
  %1292 = vmatpush1.xpose.msra.mxu0 0.0
  %1293 = vmatprep.subr.mxu0 0.0
  %1294 = vmatpush1.xpose.msra.mxu0 0.0
  %1295 = vmatprep.subr.mxu0 0.0
  %1296 = vmatpush1.xpose.msra.mxu0 0.0
  %1297 = vmatprep.subr.mxu0 0.0
  %1298 = vmatpush1.xpose.msra.mxu0 0.0
  %1299 = vmatprep.subr.mxu0 0.0
  %1300 = vmatpush1.xpose.msra.mxu0 0.0
  %1301 = vmatprep.subr.mxu0 0.0
  %1302 = vmatpush1.xpose.msra.mxu0 0.0
  %1303 = vmatprep.subr.mxu0 0.0
  %1304 = vmatpush1.xpose.msra.mxu0 0.0
  %1305 = vmatprep.subr.mxu0 0.0
  %1306 = vmatpush1.xpose.msra.mxu0 0.0
  %1307 = vmatprep.subr.mxu0 0.0
  %1308 = vmatpush1.xpose.msra.mxu0 0.0
  %1309 = vmatprep.subr.mxu0 0.0
  %1310 = vmatpush1.xpose.msra.mxu0 0.0
  %1311 = vmatprep.subr.mxu0 0.0
  %1312 = vmatpush1.xpose.msra.mxu0 0.0
  %1313 = vmatprep.subr.mxu0 0.0
  %1314 = vmatpush1.xpose.msra.mxu0 0.0
  %1315 = vmatprep.subr.mxu0 0.0
  %1316 = vmatpush1.xpose.msra.mxu0 0.0
  %1317 = vmatprep.subr.mxu0 0.0
  %1318 = vmatpush1.xpose.msra.mxu0 0.0
  %1319 = vmatprep.subr.mxu0 0.0
  %1320 = vmatpush1.xpose.msra.mxu0 0.0
  %1321 = vmatprep.subr.mxu0 0.0
  %1322 = vmatpush1.xpose.msra.mxu0 0.0
  %1323 = vmatprep.subr.mxu0 0.0
  %1324 = vmatpush1.xpose.msra.mxu0 0.0
  %1325 = vmatprep.subr.mxu0 0.0
  %1326 = vmatpush1.xpose.msra.mxu0 0.0
  %1327 = vmatprep.mubr.f32.mxu0 0.0
  %1328 = vmatmul.mubr.f32.gmra.mrb[0].mxu0 %v1258
  %v1329 = vpop.f32.mrb[0].mxu0
  %v1330 = vadd.f32 %v682, %v1329
  %v1331 = vpop.f32.mrb[0].mxu0
  %1332 = vmatprep.mubr.f32.mxu0 0.0
  %1333 = vmatmul.mubr.f32.gmra.mrb[0].mxu0 %v1261
  %v1334 = vpop.f32.mrb[0].mxu0
  %v1335 = vadd.f32 %v687, %v1334
  %v1336 = vpop.f32.mrb[0].mxu0
  %1337 = vdwg.mxu0
  %v1338 = vmul.f32 %v763, 0.5
  %v1339 = vmul.f32 %v768, 0.5
  %v1340 = vmul.f32 %v844, 0.5
  %v1341 = vmul.f32 %v849, 0.5
  %v1342 = vmul.f32 %v925, 0.5
  %v1343 = vmul.f32 %v930, 0.5
  %v1344 = vmul.f32 %v1006, 0.5
  %v1345 = vmul.f32 %v1011, 0.5
  %v1346 = vmul.f32 %v1087, 0.5
  %v1347 = vmul.f32 %v1092, 0.5
  %v1348 = vmul.f32 %v1168, 0.5
  %v1349 = vmul.f32 %v1173, 0.5
  %v1350 = vmul.f32 %v1249, 0.5
  %v1351 = vmul.f32 %v1254, 0.5
  %v1352 = vmul.f32 %v1330, 0.5
  %v1353 = vmul.f32 %v1335, 0.5
  %1354 = vst.msk [vmem:[#allocation2] sm:$0xff] %vm41, %v1338
  %1355 = vst.msk [vmem:[#allocation2 + $0x8] sm:$0xff] %vm41, %v1339
  %1356 = vst.msk [vmem:[#allocation2 + $0x10] sm:$0xff] %vm41, %v1340
  %1357 = vst.msk [vmem:[#allocation2 + $0x18] sm:$0xff] %vm41, %v1341
  %1358 = vst.msk [vmem:[#allocation2 + $0x20] sm:$0xff] %vm41, %v1342
  %1359 = vst.msk [vmem:[#allocation2 + $0x28] sm:$0xff] %vm41, %v1343
  %1360 = vst.msk [vmem:[#allocation2 + $0x30] sm:$0xff] %vm41, %v1344
  %1361 = vst.msk [vmem:[#allocation2 + $0x38] sm:$0xff] %vm41, %v1345
  %1362 = vst.msk [vmem:[#allocation2 + $0x40] sm:$0xff] %vm41, %v1346
  %1363 = vst.msk [vmem:[#allocation2 + $0x48] sm:$0xff] %vm41, %v1347
  %1364 = vst.msk [vmem:[#allocation2 + $0x50] sm:$0xff] %vm41, %v1348
  %1365 = vst.msk [vmem:[#allocation2 + $0x58] sm:$0xff] %vm41, %v1349
  %1366 = vst.msk [vmem:[#allocation2 + $0x60] sm:$0xff] %vm41, %v1350
  %1367 = vst.msk [vmem:[#allocation2 + $0x68] sm:$0xff] %vm41, %v1351
  %1368 = vst.msk [vmem:[#allocation2 + $0x70] sm:$0xff] %vm41, %v1352
  %1369 = vst.msk [vmem:[#allocation2 + $0x78] sm:$0xff] %vm41, %v1353
  %v1370 = vld [vmem:[#allocation2] sm:$0x1]
  %v1371 = vld [vmem:[#allocation2 + $0x10] sm:$0x1]
  %v1372 = vld [vmem:[#allocation2 + $0x20] sm:$0x1]
  %v1373 = vld [vmem:[#allocation2 + $0x30] sm:$0x1]
  %v1374 = vld [vmem:[#allocation2 + $0x40] sm:$0x1]
  %v1375 = vld [vmem:[#allocation2 + $0x50] sm:$0x1]
  %v1376 = vld [vmem:[#allocation2 + $0x60] sm:$0x1]
  %v1377 = vld [vmem:[#allocation2 + $0x70] sm:$0x1]
  %v1386 = vrot.slane %v1371, 7
  %vm1387 = vcmask 1041409
  %v1388 = vsel %vm1387, %v1386, %v1370
  %v1389 = vrot.slane %v1372, 6
  %vm1390 = vcmask 1042434
  %v1391 = vsel %vm1390, %v1389, %v1388
  %v1392 = vrot.slane %v1373, 5
  %vm1393 = vcmask 1043459
  %v1394 = vsel %vm1393, %v1392, %v1391
  %v1395 = vrot.slane %v1374, 4
  %vm1396 = vcmask 1044484
  %v1397 = vsel %vm1396, %v1395, %v1394
  %v1398 = vrot.slane %v1375, 3
  %vm1399 = vcmask 1045509
  %v1400 = vsel %vm1399, %v1398, %v1397
  %v1401 = vrot.slane %v1376, 2
  %vm1402 = vcmask 1046534
  %v1403 = vsel %vm1402, %v1401, %v1400
  %v1404 = vrot.slane %v1377, 1
  %vm1405 = vcmask 1047559
  %v1406 = vsel %vm1405, %v1404, %v1403
  %1408 = vst.msk [vmem:[%s1] sm:$0xff] %vm41, %v1406
  %v1409 = vld [vmem:[#allocation2 + $0x1] sm:$0x1]
  %v1410 = vld [vmem:[#allocation2 + $0x11] sm:$0x1]
  %v1411 = vld [vmem:[#allocation2 + $0x21] sm:$0x1]
  %v1412 = vld [vmem:[#allocation2 + $0x31] sm:$0x1]
  %v1413 = vld [vmem:[#allocation2 + $0x41] sm:$0x1]
  %v1414 = vld [vmem:[#allocation2 + $0x51] sm:$0x1]
  %v1415 = vld [vmem:[#allocation2 + $0x61] sm:$0x1]
  %v1416 = vld [vmem:[#allocation2 + $0x71] sm:$0x1]
  %v1425 = vrot.slane %v1410, 7
  %v1426 = vsel %vm1387, %v1425, %v1409
  %v1427 = vrot.slane %v1411, 6
  %v1428 = vsel %vm1390, %v1427, %v1426
  %v1429 = vrot.slane %v1412, 5
  %v1430 = vsel %vm1393, %v1429, %v1428
  %v1431 = vrot.slane %v1413, 4
  %v1432 = vsel %vm1396, %v1431, %v1430
  %v1433 = vrot.slane %v1414, 3
  %v1434 = vsel %vm1399, %v1433, %v1432
  %v1435 = vrot.slane %v1415, 2
  %v1436 = vsel %vm1402, %v1435, %v1434
  %v1437 = vrot.slane %v1416, 1
  %v1438 = vsel %vm1405, %v1437, %v1436
  %1439 = vrot.lane.b32.xlu0 %v1438, 16
  %v1440 = vpop.permute.xlu0 %1439
  %vm1442 = vcmask 261248
  %1443 = vst.msk [vmem:[%s1] sm:$0xff] %vm1442, %v1440
  %v1444 = vld [vmem:[#allocation2 + $0x2] sm:$0x1]
  %v1445 = vld [vmem:[#allocation2 + $0x12] sm:$0x1]
  %v1446 = vld [vmem:[#allocation2 + $0x22] sm:$0x1]
  %v1447 = vld [vmem:[#allocation2 + $0x32] sm:$0x1]
  %v1448 = vld [vmem:[#allocation2 + $0x42] sm:$0x1]
  %v1449 = vld [vmem:[#allocation2 + $0x52] sm:$0x1]
  %v1450 = vld [vmem:[#allocation2 + $0x62] sm:$0x1]
  %v1451 = vld [vmem:[#allocation2 + $0x72] sm:$0x1]
  %v1460 = vrot.slane %v1445, 7
  %v1461 = vsel %vm1387, %v1460, %v1444
  %v1462 = vrot.slane %v1446, 6
  %v1463 = vsel %vm1390, %v1462, %v1461
  %v1464 = vrot.slane %v1447, 5
  %v1465 = vsel %vm1393, %v1464, %v1463
  %v1466 = vrot.slane %v1448, 4
  %v1467 = vsel %vm1396, %v1466, %v1465
  %v1468 = vrot.slane %v1449, 3
  %v1469 = vsel %vm1399, %v1468, %v1467
  %v1470 = vrot.slane %v1450, 2
  %v1471 = vsel %vm1402, %v1470, %v1469
  %v1472 = vrot.slane %v1451, 1
  %v1473 = vsel %vm1405, %v1472, %v1471
  %1474 = vrot.lane.b32.xlu0 %v1473, 32
  %v1475 = vpop.permute.xlu0 %1474
  %vm1477 = vcmask 392448
  %1478 = vst.msk [vmem:[%s1] sm:$0xff] %vm1477, %v1475
  %v1479 = vld [vmem:[#allocation2 + $0x3] sm:$0x1]
  %v1480 = vld [vmem:[#allocation2 + $0x13] sm:$0x1]
  %v1481 = vld [vmem:[#allocation2 + $0x23] sm:$0x1]
  %v1482 = vld [vmem:[#allocation2 + $0x33] sm:$0x1]
  %v1483 = vld [vmem:[#allocation2 + $0x43] sm:$0x1]
  %v1484 = vld [vmem:[#allocation2 + $0x53] sm:$0x1]
  %v1485 = vld [vmem:[#allocation2 + $0x63] sm:$0x1]
  %v1486 = vld [vmem:[#allocation2 + $0x73] sm:$0x1]
  %v1495 = vrot.slane %v1480, 7
  %v1496 = vsel %vm1387, %v1495, %v1479
  %v1497 = vrot.slane %v1481, 6
  %v1498 = vsel %vm1390, %v1497, %v1496
  %v1499 = vrot.slane %v1482, 5
  %v1500 = vsel %vm1393, %v1499, %v1498
  %v1501 = vrot.slane %v1483, 4
  %v1502 = vsel %vm1396, %v1501, %v1500
  %v1503 = vrot.slane %v1484, 3
  %v1504 = vsel %vm1399, %v1503, %v1502
  %v1505 = vrot.slane %v1485, 2
  %v1506 = vsel %vm1402, %v1505, %v1504
  %v1507 = vrot.slane %v1486, 1
  %v1508 = vsel %vm1405, %v1507, %v1506
  %1509 = vrot.lane.b32.xlu0 %v1508, 48
  %v1510 = vpop.permute.xlu0 %1509
  %vm1512 = vcmask 523648
  %1513 = vst.msk [vmem:[%s1] sm:$0xff] %vm1512, %v1510
  %v1514 = vld [vmem:[#allocation2 + $0x4] sm:$0x1]
  %v1515 = vld [vmem:[#allocation2 + $0x14] sm:$0x1]
  %v1516 = vld [vmem:[#allocation2 + $0x24] sm:$0x1]
  %v1517 = vld [vmem:[#allocation2 + $0x34] sm:$0x1]
  %v1518 = vld [vmem:[#allocation2 + $0x44] sm:$0x1]
  %v1519 = vld [vmem:[#allocation2 + $0x54] sm:$0x1]
  %v1520 = vld [vmem:[#allocation2 + $0x64] sm:$0x1]
  %v1521 = vld [vmem:[#allocation2 + $0x74] sm:$0x1]
  %v1530 = vrot.slane %v1515, 7
  %v1531 = vsel %vm1387, %v1530, %v1514
  %v1532 = vrot.slane %v1516, 6
  %v1533 = vsel %vm1390, %v1532, %v1531
  %v1534 = vrot.slane %v1517, 5
  %v1535 = vsel %vm1393, %v1534, %v1533
  %v1536 = vrot.slane %v1518, 4
  %v1537 = vsel %vm1396, %v1536, %v1535
  %v1538 = vrot.slane %v1519, 3
  %v1539 = vsel %vm1399, %v1538, %v1537
  %v1540 = vrot.slane %v1520, 2
  %v1541 = vsel %vm1402, %v1540, %v1539
  %v1542 = vrot.slane %v1521, 1
  %v1543 = vsel %vm1405, %v1542, %v1541
  %1544 = vrot.lane.b32.xlu0 %v1543, 64
  %v1545 = vpop.permute.xlu0 %1544
  %vm1547 = vcmask 654848
  %1548 = vst.msk [vmem:[%s1] sm:$0xff] %vm1547, %v1545
  %v1549 = vld [vmem:[#allocation2 + $0x5] sm:$0x1]
  %v1550 = vld [vmem:[#allocation2 + $0x15] sm:$0x1]
  %v1551 = vld [vmem:[#allocation2 + $0x25] sm:$0x1]
  %v1552 = vld [vmem:[#allocation2 + $0x35] sm:$0x1]
  %v1553 = vld [vmem:[#allocation2 + $0x45] sm:$0x1]
  %v1554 = vld [vmem:[#allocation2 + $0x55] sm:$0x1]
  %v1555 = vld [vmem:[#allocation2 + $0x65] sm:$0x1]
  %v1556 = vld [vmem:[#allocation2 + $0x75] sm:$0x1]
  %v1565 = vrot.slane %v1550, 7
  %v1566 = vsel %vm1387, %v1565, %v1549
  %v1567 = vrot.slane %v1551, 6
  %v1568 = vsel %vm1390, %v1567, %v1566
  %v1569 = vrot.slane %v1552, 5
  %v1570 = vsel %vm1393, %v1569, %v1568
  %v1571 = vrot.slane %v1553, 4
  %v1572 = vsel %vm1396, %v1571, %v1570
  %v1573 = vrot.slane %v1554, 3
  %v1574 = vsel %vm1399, %v1573, %v1572
  %v1575 = vrot.slane %v1555, 2
  %v1576 = vsel %vm1402, %v1575, %v1574
  %v1577 = vrot.slane %v1556, 1
  %v1578 = vsel %vm1405, %v1577, %v1576
  %1579 = vrot.lane.b32.xlu0 %v1578, 80
  %v1580 = vpop.permute.xlu0 %1579
  %vm1582 = vcmask 786048
  %1583 = vst.msk [vmem:[%s1] sm:$0xff] %vm1582, %v1580
  %v1584 = vld [vmem:[#allocation2 + $0x6] sm:$0x1]
  %v1585 = vld [vmem:[#allocation2 + $0x16] sm:$0x1]
  %v1586 = vld [vmem:[#allocation2 + $0x26] sm:$0x1]
  %v1587 = vld [vmem:[#allocation2 + $0x36] sm:$0x1]
  %v1588 = vld [vmem:[#allocation2 + $0x46] sm:$0x1]
  %v1589 = vld [vmem:[#allocation2 + $0x56] sm:$0x1]
  %v1590 = vld [vmem:[#allocation2 + $0x66] sm:$0x1]
  %v1591 = vld [vmem:[#allocation2 + $0x76] sm:$0x1]
  %v1600 = vrot.slane %v1585, 7
  %v1601 = vsel %vm1387, %v1600, %v1584
  %v1602 = vrot.slane %v1586, 6
  %v1603 = vsel %vm1390, %v1602, %v1601
  %v1604 = vrot.slane %v1587, 5
  %v1605 = vsel %vm1393, %v1604, %v1603
  %v1606 = vrot.slane %v1588, 4
  %v1607 = vsel %vm1396, %v1606, %v1605
  %v1608 = vrot.slane %v1589, 3
  %v1609 = vsel %vm1399, %v1608, %v1607
  %v1610 = vrot.slane %v1590, 2
  %v1611 = vsel %vm1402, %v1610, %v1609
  %v1612 = vrot.slane %v1591, 1
  %v1613 = vsel %vm1405, %v1612, %v1611
  %1614 = vrot.lane.b32.xlu0 %v1613, 96
  %v1615 = vpop.permute.xlu0 %1614
  %vm1617 = vcmask 917248
  %1618 = vst.msk [vmem:[%s1] sm:$0xff] %vm1617, %v1615
  %v1619 = vld [vmem:[#allocation2 + $0x7] sm:$0x1]
  %v1620 = vld [vmem:[#allocation2 + $0x17] sm:$0x1]
  %v1621 = vld [vmem:[#allocation2 + $0x27] sm:$0x1]
  %v1622 = vld [vmem:[#allocation2 + $0x37] sm:$0x1]
  %v1623 = vld [vmem:[#allocation2 + $0x47] sm:$0x1]
  %v1624 = vld [vmem:[#allocation2 + $0x57] sm:$0x1]
  %v1625 = vld [vmem:[#allocation2 + $0x67] sm:$0x1]
  %v1626 = vld [vmem:[#allocation2 + $0x77] sm:$0x1]
  %v1635 = vrot.slane %v1620, 7
  %v1636 = vsel %vm1387, %v1635, %v1619
  %v1637 = vrot.slane %v1621, 6
  %v1638 = vsel %vm1390, %v1637, %v1636
  %v1639 = vrot.slane %v1622, 5
  %v1640 = vsel %vm1393, %v1639, %v1638
  %v1641 = vrot.slane %v1623, 4
  %v1642 = vsel %vm1396, %v1641, %v1640
  %v1643 = vrot.slane %v1624, 3
  %v1644 = vsel %vm1399, %v1643, %v1642
  %v1645 = vrot.slane %v1625, 2
  %v1646 = vsel %vm1402, %v1645, %v1644
  %v1647 = vrot.slane %v1626, 1
  %v1648 = vsel %vm1405, %v1647, %v1646
  %1649 = vrot.lane.b32.xlu0 %v1648, 112
  %v1650 = vpop.permute.xlu0 %1649
  %vm1652 = vcmask 1048448
  %1653 = vst.msk [vmem:[%s1] sm:$0xff] %vm1652, %v1650
  %v1654 = vld [vmem:[#allocation2 + $0x8] sm:$0x1]
  %v1655 = vld [vmem:[#allocation2 + $0x18] sm:$0x1]
  %v1656 = vld [vmem:[#allocation2 + $0x28] sm:$0x1]
  %v1657 = vld [vmem:[#allocation2 + $0x38] sm:$0x1]
  %v1658 = vld [vmem:[#allocation2 + $0x48] sm:$0x1]
  %v1659 = vld [vmem:[#allocation2 + $0x58] sm:$0x1]
  %v1660 = vld [vmem:[#allocation2 + $0x68] sm:$0x1]
  %v1661 = vld [vmem:[#allocation2 + $0x78] sm:$0x1]
  %v1670 = vrot.slane %v1655, 7
  %v1671 = vsel %vm1387, %v1670, %v1654
  %v1672 = vrot.slane %v1656, 6
  %v1673 = vsel %vm1390, %v1672, %v1671
  %v1674 = vrot.slane %v1657, 5
  %v1675 = vsel %vm1393, %v1674, %v1673
  %v1676 = vrot.slane %v1658, 4
  %v1677 = vsel %vm1396, %v1676, %v1675
  %v1678 = vrot.slane %v1659, 3
  %v1679 = vsel %vm1399, %v1678, %v1677
  %v1680 = vrot.slane %v1660, 2
  %v1681 = vsel %vm1402, %v1680, %v1679
  %v1682 = vrot.slane %v1661, 1
  %v1683 = vsel %vm1405, %v1682, %v1681
  %1685 = vst.msk [vmem:[%s1 + $0x8] sm:$0xff] %vm41, %v1683
  %v1686 = vld [vmem:[#allocation2 + $0x9] sm:$0x1]
  %v1687 = vld [vmem:[#allocation2 + $0x19] sm:$0x1]
  %v1688 = vld [vmem:[#allocation2 + $0x29] sm:$0x1]
  %v1689 = vld [vmem:[#allocation2 + $0x39] sm:$0x1]
  %v1690 = vld [vmem:[#allocation2 + $0x49] sm:$0x1]
  %v1691 = vld [vmem:[#allocation2 + $0x59] sm:$0x1]
  %v1692 = vld [vmem:[#allocation2 + $0x69] sm:$0x1]
  %v1693 = vld [vmem:[#allocation2 + $0x79] sm:$0x1]
  %v1702 = vrot.slane %v1687, 7
  %v1703 = vsel %vm1387, %v1702, %v1686
  %v1704 = vrot.slane %v1688, 6
  %v1705 = vsel %vm1390, %v1704, %v1703
  %v1706 = vrot.slane %v1689, 5
  %v1707 = vsel %vm1393, %v1706, %v1705
  %v1708 = vrot.slane %v1690, 4
  %v1709 = vsel %vm1396, %v1708, %v1707
  %v1710 = vrot.slane %v1691, 3
  %v1711 = vsel %vm1399, %v1710, %v1709
  %v1712 = vrot.slane %v1692, 2
  %v1713 = vsel %vm1402, %v1712, %v1711
  %v1714 = vrot.slane %v1693, 1
  %v1715 = vsel %vm1405, %v1714, %v1713
  %1716 = vrot.lane.b32.xlu0 %v1715, 16
  %v1717 = vpop.permute.xlu0 %1716
  %1719 = vst.msk [vmem:[%s1 + $0x8] sm:$0xff] %vm1442, %v1717
  %v1720 = vld [vmem:[#allocation2 + $0xa] sm:$0x1]
  %v1721 = vld [vmem:[#allocation2 + $0x1a] sm:$0x1]
  %v1722 = vld [vmem:[#allocation2 + $0x2a] sm:$0x1]
  %v1723 = vld [vmem:[#allocation2 + $0x3a] sm:$0x1]
  %v1724 = vld [vmem:[#allocation2 + $0x4a] sm:$0x1]
  %v1725 = vld [vmem:[#allocation2 + $0x5a] sm:$0x1]
  %v1726 = vld [vmem:[#allocation2 + $0x6a] sm:$0x1]
  %v1727 = vld [vmem:[#allocation2 + $0x7a] sm:$0x1]
  %v1736 = vrot.slane %v1721, 7
  %v1737 = vsel %vm1387, %v1736, %v1720
  %v1738 = vrot.slane %v1722, 6
  %v1739 = vsel %vm1390, %v1738, %v1737
  %v1740 = vrot.slane %v1723, 5
  %v1741 = vsel %vm1393, %v1740, %v1739
  %v1742 = vrot.slane %v1724, 4
  %v1743 = vsel %vm1396, %v1742, %v1741
  %v1744 = vrot.slane %v1725, 3
  %v1745 = vsel %vm1399, %v1744, %v1743
  %v1746 = vrot.slane %v1726, 2
  %v1747 = vsel %vm1402, %v1746, %v1745
  %v1748 = vrot.slane %v1727, 1
  %v1749 = vsel %vm1405, %v1748, %v1747
  %1750 = vrot.lane.b32.xlu0 %v1749, 32
  %v1751 = vpop.permute.xlu0 %1750
  %1753 = vst.msk [vmem:[%s1 + $0x8] sm:$0xff] %vm1477, %v1751
  %v1754 = vld [vmem:[#allocation2 + $0xb] sm:$0x1]
  %v1755 = vld [vmem:[#allocation2 + $0x1b] sm:$0x1]
  %v1756 = vld [vmem:[#allocation2 + $0x2b] sm:$0x1]
  %v1757 = vld [vmem:[#allocation2 + $0x3b] sm:$0x1]
  %v1758 = vld [vmem:[#allocation2 + $0x4b] sm:$0x1]
  %v1759 = vld [vmem:[#allocation2 + $0x5b] sm:$0x1]
  %v1760 = vld [vmem:[#allocation2 + $0x6b] sm:$0x1]
  %v1761 = vld [vmem:[#allocation2 + $0x7b] sm:$0x1]
  %v1770 = vrot.slane %v1755, 7
  %v1771 = vsel %vm1387, %v1770, %v1754
  %v1772 = vrot.slane %v1756, 6
  %v1773 = vsel %vm1390, %v1772, %v1771
  %v1774 = vrot.slane %v1757, 5
  %v1775 = vsel %vm1393, %v1774, %v1773
  %v1776 = vrot.slane %v1758, 4
  %v1777 = vsel %vm1396, %v1776, %v1775
  %v1778 = vrot.slane %v1759, 3
  %v1779 = vsel %vm1399, %v1778, %v1777
  %v1780 = vrot.slane %v1760, 2
  %v1781 = vsel %vm1402, %v1780, %v1779
  %v1782 = vrot.slane %v1761, 1
  %v1783 = vsel %vm1405, %v1782, %v1781
  %1784 = vrot.lane.b32.xlu0 %v1783, 48
  %v1785 = vpop.permute.xlu0 %1784
  %1787 = vst.msk [vmem:[%s1 + $0x8] sm:$0xff] %vm1512, %v1785
  %v1788 = vld [vmem:[#allocation2 + $0xc] sm:$0x1]
  %v1789 = vld [vmem:[#allocation2 + $0x1c] sm:$0x1]
  %v1790 = vld [vmem:[#allocation2 + $0x2c] sm:$0x1]
  %v1791 = vld [vmem:[#allocation2 + $0x3c] sm:$0x1]
  %v1792 = vld [vmem:[#allocation2 + $0x4c] sm:$0x1]
  %v1793 = vld [vmem:[#allocation2 + $0x5c] sm:$0x1]
  %v1794 = vld [vmem:[#allocation2 + $0x6c] sm:$0x1]
  %v1795 = vld [vmem:[#allocation2 + $0x7c] sm:$0x1]
  %v1804 = vrot.slane %v1789, 7
  %v1805 = vsel %vm1387, %v1804, %v1788
  %v1806 = vrot.slane %v1790, 6
  %v1807 = vsel %vm1390, %v1806, %v1805
  %v1808 = vrot.slane %v1791, 5
  %v1809 = vsel %vm1393, %v1808, %v1807
  %v1810 = vrot.slane %v1792, 4
  %v1811 = vsel %vm1396, %v1810, %v1809
  %v1812 = vrot.slane %v1793, 3
  %v1813 = vsel %vm1399, %v1812, %v1811
  %v1814 = vrot.slane %v1794, 2
  %v1815 = vsel %vm1402, %v1814, %v1813
  %v1816 = vrot.slane %v1795, 1
  %v1817 = vsel %vm1405, %v1816, %v1815
  %1818 = vrot.lane.b32.xlu0 %v1817, 64
  %v1819 = vpop.permute.xlu0 %1818
  %1821 = vst.msk [vmem:[%s1 + $0x8] sm:$0xff] %vm1547, %v1819
  %v1822 = vld [vmem:[#allocation2 + $0xd] sm:$0x1]
  %v1823 = vld [vmem:[#allocation2 + $0x1d] sm:$0x1]
  %v1824 = vld [vmem:[#allocation2 + $0x2d] sm:$0x1]
  %v1825 = vld [vmem:[#allocation2 + $0x3d] sm:$0x1]
  %v1826 = vld [vmem:[#allocation2 + $0x4d] sm:$0x1]
  %v1827 = vld [vmem:[#allocation2 + $0x5d] sm:$0x1]
  %v1828 = vld [vmem:[#allocation2 + $0x6d] sm:$0x1]
  %v1829 = vld [vmem:[#allocation2 + $0x7d] sm:$0x1]
  %v1838 = vrot.slane %v1823, 7
  %v1839 = vsel %vm1387, %v1838, %v1822
  %v1840 = vrot.slane %v1824, 6
  %v1841 = vsel %vm1390, %v1840, %v1839
  %v1842 = vrot.slane %v1825, 5
  %v1843 = vsel %vm1393, %v1842, %v1841
  %v1844 = vrot.slane %v1826, 4
  %v1845 = vsel %vm1396, %v1844, %v1843
  %v1846 = vrot.slane %v1827, 3
  %v1847 = vsel %vm1399, %v1846, %v1845
  %v1848 = vrot.slane %v1828, 2
  %v1849 = vsel %vm1402, %v1848, %v1847
  %v1850 = vrot.slane %v1829, 1
  %v1851 = vsel %vm1405, %v1850, %v1849
  %1852 = vrot.lane.b32.xlu0 %v1851, 80
  %v1853 = vpop.permute.xlu0 %1852
  %1855 = vst.msk [vmem:[%s1 + $0x8] sm:$0xff] %vm1582, %v1853
  %v1856 = vld [vmem:[#allocation2 + $0xe] sm:$0x1]
  %v1857 = vld [vmem:[#allocation2 + $0x1e] sm:$0x1]
  %v1858 = vld [vmem:[#allocation2 + $0x2e] sm:$0x1]
  %v1859 = vld [vmem:[#allocation2 + $0x3e] sm:$0x1]
  %v1860 = vld [vmem:[#allocation2 + $0x4e] sm:$0x1]
  %v1861 = vld [vmem:[#allocation2 + $0x5e] sm:$0x1]
  %v1862 = vld [vmem:[#allocation2 + $0x6e] sm:$0x1]
  %v1863 = vld [vmem:[#allocation2 + $0x7e] sm:$0x1]
  %v1872 = vrot.slane %v1857, 7
  %v1873 = vsel %vm1387, %v1872, %v1856
  %v1874 = vrot.slane %v1858, 6
  %v1875 = vsel %vm1390, %v1874, %v1873
  %v1876 = vrot.slane %v1859, 5
  %v1877 = vsel %vm1393, %v1876, %v1875
  %v1878 = vrot.slane %v1860, 4
  %v1879 = vsel %vm1396, %v1878, %v1877
  %v1880 = vrot.slane %v1861, 3
  %v1881 = vsel %vm1399, %v1880, %v1879
  %v1882 = vrot.slane %v1862, 2
  %v1883 = vsel %vm1402, %v1882, %v1881
  %v1884 = vrot.slane %v1863, 1
  %v1885 = vsel %vm1405, %v1884, %v1883
  %1886 = vrot.lane.b32.xlu0 %v1885, 96
  %v1887 = vpop.permute.xlu0 %1886
  %1889 = vst.msk [vmem:[%s1 + $0x8] sm:$0xff] %vm1617, %v1887
  %v1890 = vld [vmem:[#allocation2 + $0xf] sm:$0x1]
  %v1891 = vld [vmem:[#allocation2 + $0x1f] sm:$0x1]
  %v1892 = vld [vmem:[#allocation2 + $0x2f] sm:$0x1]
  %v1893 = vld [vmem:[#allocation2 + $0x3f] sm:$0x1]
  %v1894 = vld [vmem:[#allocation2 + $0x4f] sm:$0x1]
  %v1895 = vld [vmem:[#allocation2 + $0x5f] sm:$0x1]
  %v1896 = vld [vmem:[#allocation2 + $0x6f] sm:$0x1]
  %v1897 = vld [vmem:[#allocation2 + $0x7f] sm:$0x1]
  %v1906 = vrot.slane %v1891, 7
  %v1907 = vsel %vm1387, %v1906, %v1890
  %v1908 = vrot.slane %v1892, 6
  %v1909 = vsel %vm1390, %v1908, %v1907
  %v1910 = vrot.slane %v1893, 5
  %v1911 = vsel %vm1393, %v1910, %v1909
  %v1912 = vrot.slane %v1894, 4
  %v1913 = vsel %vm1396, %v1912, %v1911
  %v1914 = vrot.slane %v1895, 3
  %v1915 = vsel %vm1399, %v1914, %v1913
  %v1916 = vrot.slane %v1896, 2
  %v1917 = vsel %vm1402, %v1916, %v1915
  %v1918 = vrot.slane %v1897, 1
  %v1919 = vsel %vm1405, %v1918, %v1917
  %1920 = vrot.lane.b32.xlu0 %v1919, 112
  %v1921 = vpop.permute.xlu0 %1920
  %1923 = vst.msk [vmem:[%s1 + $0x8] sm:$0xff] %vm1652, %v1921
  // Predicated region
  $region6: #{e2r_radar.1} parent=0 // pred_check
    _
  $region7: #{e2r_radar.1} parent=0 // pred_check_branch
    %1925 = sbr.rel (0) target = $region9
  $region8: #{e2r_radar.1} parent=0 // pred_region
    _
  $region9: #{e2r_radar.1} parent=0 // pred_fallthru
    _
  // Predicated region
  $region10: #{e2r_radar.1} parent=0 // pred_check
    _
  $region11: #{e2r_radar.1} parent=0 // pred_check_branch
    %1927 = sbr.rel (0) target = $region13
  $region12: #{e2r_radar.1} parent=0 // pred_region
    _
  $region13: #{e2r_radar.1} parent=0 // pred_fallthru
    _

</llo_original>
